<compile_context>
chip_gen: v7x
topology: tpu7x:2x2x1
jax: 0.10.0
libtpu: 0.0.40
codegen_flags: <defaults>
</compile_context>

<pallas_src>
import jax
import jax.numpy as jnp
from jax import lax
from jax.experimental import pallas as pl
from jax.experimental.pallas import tpu as pltpu

# ---- model dimensions (from the nn.Module __init__) ----
C_IN, L_IN, K, C_OUT = 16, 49, 41, 29
T = L_IN - K + 1                  # 9 conv output positions
F2_IN, F2_OUT = C_OUT * T, 97     # 261 -> 97
F3_OUT = 72
F5_OUT = 35
F7_OUT = 10

# ---- lane-dense padded dimensions ----
P_IN = 896     # 784 -> 7*128
P_H1 = 384     # 261 -> 3*128
P_SM = 128     # 97 / 72 / 35 / 10 -> 128

NEG_BIG = -1.0e30  # padding bias for unused logit columns


def conv1d_then_linear_kernel(x_ref, weff_ref, w2_ref, w3_ref, b3_ref,
                              w5_ref, w7_ref, b7_ref, out_ref):
    # x_ref:    (TB, 896) bf16   flat padded input tile
    # weff_ref: (896, 384) bf16  Conv1d folded into a dense matmul (fused ReLU after)
    # w2_ref:   (384, 128) f32   f2 (261->97), padded
    # w3_ref:   (128, 128) f32   f3 (97->72), padded;  b3_ref: (1, 128)
    # w5_ref:   (128, 128) f32   f5 (72->35), padded
    # w7_ref:   (128, 128) f32   f7 (35->10), padded;  b7_ref: (1, 128) (-1e30 in pad cols)
    # out_ref:  (TB, 128) f32    log-probs in cols [0, 10)

    # f0 Conv1d (no bias) + f1 ReLU, as a single MXU matmul.
    h = jnp.maximum(
        jnp.dot(x_ref[...], weff_ref[...], preferred_element_type=jnp.float32),
        0.0)

    # f2 Linear(261->97, no bias)
    a2 = jnp.dot(h, w2_ref[...], preferred_element_type=jnp.float32)

    # f3 Linear(97->72, bias) + f4 ReLU
    a4 = jnp.maximum(
        jnp.dot(a2, w3_ref[...], preferred_element_type=jnp.float32) + b3_ref[...],
        0.0)

    # f5 Linear(72->35, no bias) + f6 ReLU
    a6 = jnp.maximum(
        jnp.dot(a4, w5_ref[...], preferred_element_type=jnp.float32), 0.0)

    # f7 Linear(35->10, bias); padded columns get bias -1e30 -> exp() == 0.
    a7 = jnp.dot(a6, w7_ref[...], preferred_element_type=jnp.float32) + b7_ref[...]

    # f8 LogSoftmax(dim=1) over the 128-wide slab (pad cols contribute 0).
    m = jnp.max(a7, axis=-1, keepdims=True)
    lse = jnp.log(jnp.sum(jnp.exp(a7 - m), axis=-1, keepdims=True))
    out_ref[...] = a7 - m - lse


def _pad2(a, rows, cols):
    return jnp.pad(a, ((0, rows - a.shape[0]), (0, cols - a.shape[1])))


def conv1d_then_linear(x, params):
    """x: any shape with leading batch dim and 16*49 = 784 trailing elements."""
    w_conv, w2, w3, b3, w5, w7, b7 = params
    batch = x.shape[0]

    # ---- glue: fold Conv1d into a dense (784, 261) matmul weight ----
    # weff[c*49 + (t+k), o*9 + t] = w_conv[o, c, k]; column order o*9+t matches
    # the PyTorch (B, 29, 9).view(B, 261) flatten.
    wcp = jnp.transpose(w_conv.astype(jnp.float32), (1, 2, 0))       # (C_IN, K, C_OUT)
    blocks = [
        jnp.pad(wcp, ((0, 0), (t, L_IN - K - t), (0, 0))).reshape(C_IN * L_IN, C_OUT)
        for t in range(T)
    ]
    weff = jnp.stack(blocks, axis=-1).reshape(C_IN * L_IN, C_OUT * T)  # (784, 261)

    # ---- glue: lane-dense padding of weights / biases ----
    weff_p = _pad2(weff, P_IN, P_H1).astype(jnp.bfloat16)             # (896, 384) bf16
    w2_p = _pad2(w2.T.astype(jnp.float32), P_H1, P_SM)                # (384, 128)
    w3_p = _pad2(w3.T.astype(jnp.float32), P_SM, P_SM)                # (128, 128)
    b3_p = jnp.pad(b3.astype(jnp.float32), (0, P_SM - F3_OUT)).reshape(1, P_SM)
    w5_p = _pad2(w5.T.astype(jnp.float32), P_SM, P_SM)                # (128, 128)
    w7_p = _pad2(w7.T.astype(jnp.float32), P_SM, P_SM)                # (128, 128)
    b7_p = jnp.full((1, P_SM), NEG_BIG, jnp.float32).at[0, :F7_OUT].set(
        b7.astype(jnp.float32))

    # ---- glue: flat, padded, bf16 input + batch tiling ----
    x_flat = x.reshape(batch, C_IN * L_IN).astype(jnp.float32)        # (B, 784)
    tb = min(512, max(8, ((batch + 7) // 8) * 8))
    b_pad = ((batch + tb - 1) // tb) * tb
    x_p = jnp.pad(x_flat, ((0, b_pad - batch), (0, P_IN - C_IN * L_IN)))
    x_p = x_p.astype(jnp.bfloat16)                                    # (B_pad, 896)

    grid = (b_pad // tb,)
    const = lambda i: (0, 0)
    out = pl.pallas_call(
        conv1d_then_linear_kernel,
        out_shape=jax.ShapeDtypeStruct((b_pad, P_SM), jnp.float32),
        grid=grid,
        in_specs=[
            pl.BlockSpec((tb, P_IN), lambda i: (i, 0)),     # x tile (pipelined)
            pl.BlockSpec((P_IN, P_H1), const),              # W_eff (resident)
            pl.BlockSpec((P_H1, P_SM), const),              # w2
            pl.BlockSpec((P_SM, P_SM), const),              # w3
            pl.BlockSpec((1, P_SM), const),                 # b3
            pl.BlockSpec((P_SM, P_SM), const),              # w5
            pl.BlockSpec((P_SM, P_SM), const),              # w7
            pl.BlockSpec((1, P_SM), const),                 # b7
        ],
        out_specs=pl.BlockSpec((tb, P_SM), lambda i: (i, 0)),
        compiler_params=pltpu.CompilerParams(
            dimension_semantics=("parallel",)),
    )(x_p, weff_p, w2_p, w3_p, b3_p, w5_p, w7_p, b7_p)

    return out[:batch, :F7_OUT]


def reference_forward(x, params):
    """Pure-JAX f32 reference matching the PyTorch forward exactly."""
    w_conv, w2, w3, b3, w5, w7, b7 = params
    batch = x.shape[0]
    x3 = x.reshape(batch, C_IN, L_IN)
    conv = lax.conv_general_dilated(
        x3, w_conv, window_strides=(1,), padding="VALID",
        dimension_numbers=("NCH", "OIH", "NCH"))                      # (B, 29, 9)
    h = jnp.maximum(conv, 0.0).reshape(batch, F2_IN)                  # (B, 261)
    a2 = h @ w2.T
    a3 = a2 @ w3.T + b3
    a4 = jnp.maximum(a3, 0.0)
    a5 = a4 @ w5.T
    a6 = jnp.maximum(a5, 0.0)
    a7 = a6 @ w7.T + b7
    return jax.nn.log_softmax(a7, axis=1)


def init_params(key):
    ks = jax.random.split(key, 7)
    w_conv = 0.05 * jax.random.normal(ks[0], (C_OUT, C_IN, K), jnp.float32)
    w2 = 0.05 * jax.random.normal(ks[1], (F2_OUT, F2_IN), jnp.float32)
    w3 = 0.05 * jax.random.normal(ks[2], (F3_OUT, F2_OUT), jnp.float32)
    b3 = 0.05 * jax.random.normal(ks[3], (F3_OUT,), jnp.float32)
    w5 = 0.05 * jax.random.normal(ks[4], (F5_OUT, F3_OUT), jnp.float32)
    w7 = 0.05 * jax.random.normal(ks[5], (F7_OUT, F5_OUT), jnp.float32)
    b7 = 0.05 * jax.random.normal(ks[6], (F7_OUT,), jnp.float32)
    return (w_conv, w2, w3, b3, w5, w7, b7)


if __name__ == "__main__":
    root = jax.random.PRNGKey(0)
    pkey, xkey = jax.random.split(root)
    params = init_params(pkey)

    # MNIST-like input: (B, 1, 28, 28) -> viewed as (B, 16, 49) in forward.
    x = jax.random.normal(xkey, (2, 1, 28, 28), jnp.float32)

    out = jax.block_until_ready(conv1d_then_linear(x, params))
    ref = jax.block_until_ready(reference_forward(x, params))

    assert out.shape == (2, F7_OUT), out.shape
    # First layer runs in bf16 (f32 accumulation) -> slightly loosened tolerance.
    assert jnp.allclose(out, ref, rtol=5e-2, atol=5e-2), (
        "max abs diff = %g" % float(jnp.max(jnp.abs(out - ref))))
    print("KERNEL_OK")
</pallas_src>

<mosaic_0001>
module attributes {stable_mosaic.version = 11 : i64} {
  func.func @conv1d_then_linear_kernel(%arg0: i32, %arg1: memref<8x896xbf16, #tpu.memory_space<vmem>>, %arg2: memref<896x384xbf16, #tpu.memory_space<vmem>>, %arg3: memref<384x128xf32, #tpu.memory_space<vmem>>, %arg4: memref<128x128xf32, #tpu.memory_space<vmem>>, %arg5: memref<1x128xf32, #tpu.memory_space<vmem>>, %arg6: memref<128x128xf32, #tpu.memory_space<vmem>>, %arg7: memref<128x128xf32, #tpu.memory_space<vmem>>, %arg8: memref<1x128xf32, #tpu.memory_space<vmem>>, %arg9: memref<8x128xf32, #tpu.memory_space<vmem>>) attributes {dimension_semantics = [#tpu.dimension_semantics<parallel>], iteration_bounds = array<i64: 1>, scalar_prefetch = 0 : i64, scratch_operands = 0 : i64, tpu.core_type = #tpu.core_type<tc>, window_params = [{transform_indices = @transform_0, window_bounds = array<i64: 8, 896>}, {pipeline_mode = #tpu.pipeline_mode<synchronous>, transform_indices = @transform_1, window_bounds = array<i64: 896, 384>}, {pipeline_mode = #tpu.pipeline_mode<synchronous>, transform_indices = @transform_2, window_bounds = array<i64: 384, 128>}, {pipeline_mode = #tpu.pipeline_mode<synchronous>, transform_indices = @transform_3, window_bounds = array<i64: 128, 128>}, {pipeline_mode = #tpu.pipeline_mode<synchronous>, transform_indices = @transform_4, window_bounds = array<i64: 1, 128>}, {pipeline_mode = #tpu.pipeline_mode<synchronous>, transform_indices = @transform_5, window_bounds = array<i64: 128, 128>}, {pipeline_mode = #tpu.pipeline_mode<synchronous>, transform_indices = @transform_6, window_bounds = array<i64: 128, 128>}, {pipeline_mode = #tpu.pipeline_mode<synchronous>, transform_indices = @transform_7, window_bounds = array<i64: 1, 128>}, {transform_indices = @transform_8, window_bounds = array<i64: 8, 128>}]} {
    %c0 = arith.constant 0 : index
    %c0_0 = arith.constant 0 : index
    %0 = vector.load %arg1[%c0, %c0_0] : memref<8x896xbf16, #tpu.memory_space<vmem>>, vector<8x896xbf16>
    %c0_1 = arith.constant 0 : index
    %c0_2 = arith.constant 0 : index
    %1 = vector.load %arg2[%c0_1, %c0_2] : memref<896x384xbf16, #tpu.memory_space<vmem>>, vector<896x384xbf16>
    %cst = arith.constant dense<0.000000e+00> : vector<8x384xf32>
    %2 = tpu.matmul %0, %1, %cst {dimension_numbers = #tpu.dot_dimension_numbers<[1], [0], [0], [1], [0, 0, 1, 1], [], []>} : vector<8x896xbf16>, vector<896x384xbf16>, vector<8x384xf32> -> vector<8x384xf32>
    %cst_3 = arith.constant 0.000000e+00 : f32
    %3 = vector.broadcast %cst_3 : f32 to vector<8x384xf32>
    %4 = arith.maximumf %2, %3 : vector<8x384xf32>
    %c0_4 = arith.constant 0 : index
    %c0_5 = arith.constant 0 : index
    %5 = vector.load %arg3[%c0_4, %c0_5] : memref<384x128xf32, #tpu.memory_space<vmem>>, vector<384x128xf32>
    %cst_6 = arith.constant dense<0.000000e+00> : vector<8x128xf32>
    %6 = tpu.matmul %4, %5, %cst_6 {dimension_numbers = #tpu.dot_dimension_numbers<[1], [0], [0], [1], [0, 0, 1, 1], [], []>} : vector<8x384xf32>, vector<384x128xf32>, vector<8x128xf32> -> vector<8x128xf32>
    %c0_7 = arith.constant 0 : index
    %c0_8 = arith.constant 0 : index
    %7 = vector.load %arg4[%c0_7, %c0_8] : memref<128x128xf32, #tpu.memory_space<vmem>>, vector<128x128xf32>
    %cst_9 = arith.constant dense<0.000000e+00> : vector<8x128xf32>
    %8 = tpu.matmul %6, %7, %cst_9 {dimension_numbers = #tpu.dot_dimension_numbers<[1], [0], [0], [1], [0, 0, 1, 1], [], []>} : vector<8x128xf32>, vector<128x128xf32>, vector<8x128xf32> -> vector<8x128xf32>
    %c0_10 = arith.constant 0 : index
    %c0_11 = arith.constant 0 : index
    %9 = vector.load %arg5[%c0_10, %c0_11] : memref<1x128xf32, #tpu.memory_space<vmem>>, vector<1x128xf32>
    %10 = vector.broadcast %9 : vector<1x128xf32> to vector<8x128xf32>
    %11 = arith.addf %8, %10 : vector<8x128xf32>
    %cst_12 = arith.constant 0.000000e+00 : f32
    %12 = vector.broadcast %cst_12 : f32 to vector<8x128xf32>
    %13 = arith.maximumf %11, %12 : vector<8x128xf32>
    %c0_13 = arith.constant 0 : index
    %c0_14 = arith.constant 0 : index
    %14 = vector.load %arg6[%c0_13, %c0_14] : memref<128x128xf32, #tpu.memory_space<vmem>>, vector<128x128xf32>
    %cst_15 = arith.constant dense<0.000000e+00> : vector<8x128xf32>
    %15 = tpu.matmul %13, %14, %cst_15 {dimension_numbers = #tpu.dot_dimension_numbers<[1], [0], [0], [1], [0, 0, 1, 1], [], []>} : vector<8x128xf32>, vector<128x128xf32>, vector<8x128xf32> -> vector<8x128xf32>
    %cst_16 = arith.constant 0.000000e+00 : f32
    %16 = vector.broadcast %cst_16 : f32 to vector<8x128xf32>
    %17 = arith.maximumf %15, %16 : vector<8x128xf32>
    %c0_17 = arith.constant 0 : index
    %c0_18 = arith.constant 0 : index
    %18 = vector.load %arg7[%c0_17, %c0_18] : memref<128x128xf32, #tpu.memory_space<vmem>>, vector<128x128xf32>
    %cst_19 = arith.constant dense<0.000000e+00> : vector<8x128xf32>
    %19 = tpu.matmul %17, %18, %cst_19 {dimension_numbers = #tpu.dot_dimension_numbers<[1], [0], [0], [1], [0, 0, 1, 1], [], []>} : vector<8x128xf32>, vector<128x128xf32>, vector<8x128xf32> -> vector<8x128xf32>
    %c0_20 = arith.constant 0 : index
    %c0_21 = arith.constant 0 : index
    %20 = vector.load %arg8[%c0_20, %c0_21] : memref<1x128xf32, #tpu.memory_space<vmem>>, vector<1x128xf32>
    %21 = vector.broadcast %20 : vector<1x128xf32> to vector<8x128xf32>
    %22 = arith.addf %19, %21 : vector<8x128xf32>
    %cst_22 = arith.constant dense<0xFF800000> : vector<8xf32>
    %23 = vector.multi_reduction <maximumf>, %22, %cst_22 [1] : vector<8x128xf32> to vector<8xf32>
    %24 = vector.shape_cast %23 : vector<8xf32> to vector<8x1xf32>
    %25 = vector.broadcast %24 : vector<8x1xf32> to vector<8x128xf32>
    %26 = arith.subf %22, %25 : vector<8x128xf32>
    %27 = math.exp %26 : vector<8x128xf32>
    %cst_23 = arith.constant dense<0.000000e+00> : vector<8xf32>
    %28 = vector.multi_reduction <add>, %27, %cst_23 [1] : vector<8x128xf32> to vector<8xf32>
    %29 = vector.shape_cast %28 : vector<8xf32> to vector<8x1xf32>
    %30 = math.log %29 : vector<8x1xf32>
    %31 = vector.broadcast %24 : vector<8x1xf32> to vector<8x128xf32>
    %32 = arith.subf %22, %31 : vector<8x128xf32>
    %33 = vector.broadcast %30 : vector<8x1xf32> to vector<8x128xf32>
    %34 = arith.subf %32, %33 : vector<8x128xf32>
    %c0_24 = arith.constant 0 : index
    %c0_25 = arith.constant 0 : index
    %35 = vector.load %arg9[%c0_24, %c0_25] : memref<8x128xf32, #tpu.memory_space<vmem>>, vector<8x128xf32>
    tpu.vector_store %arg9[%c0_24, %c0_25], %34 {strides = array<i32>} : memref<8x128xf32, #tpu.memory_space<vmem>>, vector<8x128xf32>,
    return
  }
  func.func @transform_0(%arg0: i32) -> (i32, i32) {
    %c0_i32 = arith.constant 0 : i32
    %c0_i32_0 = arith.constant 0 : i32
    return %arg0, %c0_i32 : i32, i32
  }
  func.func @transform_1(%arg0: i32) -> (i32, i32) {
    %c0_i32 = arith.constant 0 : i32
    %c0_i32_0 = arith.constant 0 : i32
    %c0_i32_1 = arith.constant 0 : i32
    return %c0_i32, %c0_i32_0 : i32, i32
  }
  func.func @transform_2(%arg0: i32) -> (i32, i32) {
    %c0_i32 = arith.constant 0 : i32
    %c0_i32_0 = arith.constant 0 : i32
    %c0_i32_1 = arith.constant 0 : i32
    return %c0_i32, %c0_i32_0 : i32, i32
  }
  func.func @transform_3(%arg0: i32) -> (i32, i32) {
    %c0_i32 = arith.constant 0 : i32
    %c0_i32_0 = arith.constant 0 : i32
    %c0_i32_1 = arith.constant 0 : i32
    return %c0_i32, %c0_i32_0 : i32, i32
  }
  func.func @transform_4(%arg0: i32) -> (i32, i32) {
    %c0_i32 = arith.constant 0 : i32
    %c0_i32_0 = arith.constant 0 : i32
    %c0_i32_1 = arith.constant 0 : i32
    return %c0_i32, %c0_i32_0 : i32, i32
  }
  func.func @transform_5(%arg0: i32) -> (i32, i32) {
    %c0_i32 = arith.constant 0 : i32
    %c0_i32_0 = arith.constant 0 : i32
    %c0_i32_1 = arith.constant 0 : i32
    return %c0_i32, %c0_i32_0 : i32, i32
  }
  func.func @transform_6(%arg0: i32) -> (i32, i32) {
    %c0_i32 = arith.constant 0 : i32
    %c0_i32_0 = arith.constant 0 : i32
    %c0_i32_1 = arith.constant 0 : i32
    return %c0_i32, %c0_i32_0 : i32, i32
  }
  func.func @transform_7(%arg0: i32) -> (i32, i32) {
    %c0_i32 = arith.constant 0 : i32
    %c0_i32_0 = arith.constant 0 : i32
    %c0_i32_1 = arith.constant 0 : i32
    return %c0_i32, %c0_i32_0 : i32, i32
  }
  func.func @transform_8(%arg0: i32) -> (i32, i32) {
    %c0_i32 = arith.constant 0 : i32
    %c0_i32_0 = arith.constant 0 : i32
    return %arg0, %c0_i32 : i32, i32
  }
}

</mosaic_0001>

<llo_original>
// kernel: tpu_custom_call.1
$region0: #{tpu_custom_call.1}
  #allocation0 [shape = 'u32[]', space=smem, size = 0x4, offset = 0x4, fixed_abs, tag = 'smem constant byte address 0x4 - core index']
  #allocation1 [shape = 'u32[144,128]{1,0:T(1,128)}', space=vmem, size = 0x12000, scoped, tag = 'internal scratch']
  %s0 = inlined_call_operand.hbm [shape: bf16[8,896], index: 0, kind: input, shape index: {}]
  %s1 = inlined_call_operand.hbm [shape: bf16[896,384], index: 1, kind: input, shape index: {}]
  %s2 = inlined_call_operand.hbm [shape: f32[384,128], index: 2, kind: input, shape index: {}]
  %s3 = inlined_call_operand.hbm [shape: f32[128,128], index: 3, kind: input, shape index: {}]
  %s4 = inlined_call_operand.vmem [shape: f32[1,128], index: 4, kind: input, shape index: {}]
  %s5 = inlined_call_operand.hbm [shape: f32[128,128], index: 5, kind: input, shape index: {}]
  %s6 = inlined_call_operand.hbm [shape: f32[128,128], index: 6, kind: input, shape index: {}]
  %s7 = inlined_call_operand.vmem [shape: f32[1,128], index: 7, kind: input, shape index: {}]
  %s8 = inlined_call_operand.hbm [shape: f32[8,128], index: 8, kind: output, shape index: {}]
  %s9 = sld [smem:[#allocation0]]
  $region66: #{tpu_custom_call.1} parent=0
    _
  %s11 = ssub.s32 1, %s9
  %s12 = scalar_select 0, %s11, %s9
  $region1: #{tpu_custom_call.1} parent=0
    #allocation2 [shape = 'u8[14336]{0}', space=vmem, size = 0x3800, scoped, tag = 'input window, operand 0, single buffered']
    #allocation3 [shape = 's32[1]{0}', space=sflag, size = 0x4, scoped, tag = 'scoped memory for tpu_custom_call.1']
    #allocation4 [shape = 's32[1]{0}', space=sflag, size = 0x4, scoped, tag = 'scoped memory for tpu_custom_call.1']
    #allocation5 [shape = 'u8[688128]{0}', space=vmem, size = 0xa8000, scoped, tag = 'input window, operand 1, single buffered']
    #allocation6 [shape = 's32[1]{0}', space=sflag, size = 0x4, scoped, tag = 'scoped memory for tpu_custom_call.1']
    #allocation7 [shape = 'u8[196608]{0}', space=vmem, size = 0x30000, scoped, tag = 'input window, operand 2, single buffered']
    #allocation8 [shape = 'u8[65536]{0}', space=vmem, size = 0x10000, scoped, tag = 'input window, operand 3, single buffered']
    #allocation9 [shape = 's32[1]{0}', space=sflag, size = 0x4, scoped, tag = 'scoped memory for tpu_custom_call.1']
    #allocation10 [shape = 'u8[65536]{0}', space=vmem, size = 0x10000, scoped, tag = 'input window, operand 5, single buffered']
    #allocation11 [shape = 'u8[65536]{0}', space=vmem, size = 0x10000, scoped, tag = 'input window, operand 6, single buffered']
    #allocation12 [shape = 's32[1]{0}', space=sflag, size = 0x4, scoped, tag = 'scoped memory for tpu_custom_call.1']
    #allocation13 [shape = 'u8[4096]{0}', space=vmem, size = 0x1000, scoped, tag = 'output window, operand 0, single buffered']
    %13 = vsyncpa [#allocation3], 0
    %14 = vsyncpa [#allocation6], 0
    %15 = vsyncpa [#allocation9], 0
    %16 = vsyncpa [#allocation12], 0
    %17 = vsyncpa [#allocation4], 0
    // Predicated region
    $region2: #{tpu_custom_call.1} parent=1 // pred_check
      _
    $region3: #{tpu_custom_call.1} parent=1 // pred_check_branch
      %19 = sbr.rel (0) target = $region5
    $region4: #{tpu_custom_call.1} parent=1 // pred_region
      %s21 = ssub.s32 448, 448
      %22 = vsyncadd [#allocation3], %s21
      %s24 = sshll.u32 [#allocation2], 4
      %s25 = int_to_ptr.vmem [resolvable:$true] %s24
      %27 = dma.hbm_to_vmem [thread:$0]  %s0, 448, %s25, [#allocation3]
    $region5: #{tpu_custom_call.1} parent=1 // pred_fallthru
      _
    // Predicated region
    $region6: #{tpu_custom_call.1} parent=1 // pred_check
      _
    $region7: #{tpu_custom_call.1} parent=1 // pred_check_branch
      %29 = sbr.rel (0) target = $region9
    $region8: #{tpu_custom_call.1} parent=1 // pred_region
      %s31 = ssub.s32 21504, 21504
      %32 = vsyncadd [#allocation6], %s31
      %s33 = sshll.u32 [#allocation5], 4
      %s34 = int_to_ptr.vmem [resolvable:$true] %s33
      %39 = dma.hbm_to_vmem [thread:$0]  %s1, 21504, %s34, [#allocation6], 192, 192, 12
    $region9: #{tpu_custom_call.1} parent=1 // pred_fallthru
      _
    // Predicated region
    $region10: #{tpu_custom_call.1} parent=1 // pred_check
      _
    $region11: #{tpu_custom_call.1} parent=1 // pred_check_branch
      %41 = sbr.rel (0) target = $region13
    $region12: #{tpu_custom_call.1} parent=1 // pred_region
      %s43 = ssub.s32 6144, 6144
      %44 = vsyncadd [#allocation6], %s43
      %s45 = sshll.u32 [#allocation7], 4
      %s46 = int_to_ptr.vmem [resolvable:$true] %s45
      %51 = dma.hbm_to_vmem [thread:$0]  %s2, 6144, %s46, [#allocation6], 128, 128, 8
    $region13: #{tpu_custom_call.1} parent=1 // pred_fallthru
      _
    // Predicated region
    $region14: #{tpu_custom_call.1} parent=1 // pred_check
      _
    $region15: #{tpu_custom_call.1} parent=1 // pred_check_branch
      %53 = sbr.rel (0) target = $region17
    $region16: #{tpu_custom_call.1} parent=1 // pred_region
      %s55 = ssub.s32 2048, 2048
      %56 = vsyncadd [#allocation9], %s55
      %s57 = sshll.u32 [#allocation8], 4
      %s58 = int_to_ptr.vmem [resolvable:$true] %s57
      %63 = dma.hbm_to_vmem [thread:$0]  %s3, 2048, %s58, [#allocation9], 128, 128, 8
    $region17: #{tpu_custom_call.1} parent=1 // pred_fallthru
      _
    // Predicated region
    $region18: #{tpu_custom_call.1} parent=1 // pred_check
      _
    $region19: #{tpu_custom_call.1} parent=1 // pred_check_branch
      %65 = sbr.rel (0) target = $region21
    $region20: #{tpu_custom_call.1} parent=1 // pred_region
      _
    $region21: #{tpu_custom_call.1} parent=1 // pred_fallthru
      _
    // Predicated region
    $region22: #{tpu_custom_call.1} parent=1 // pred_check
      _
    $region23: #{tpu_custom_call.1} parent=1 // pred_check_branch
      %67 = sbr.rel (0) target = $region25
    $region24: #{tpu_custom_call.1} parent=1 // pred_region
      %s69 = ssub.s32 2048, 2048
      %70 = vsyncadd [#allocation9], %s69
      %s71 = sshll.u32 [#allocation10], 4
      %s72 = int_to_ptr.vmem [resolvable:$true] %s71
      %77 = dma.hbm_to_vmem [thread:$0]  %s5, 2048, %s72, [#allocation9], 128, 128, 8
    $region25: #{tpu_custom_call.1} parent=1 // pred_fallthru
      _
    // Predicated region
    $region26: #{tpu_custom_call.1} parent=1 // pred_check
      _
    $region27: #{tpu_custom_call.1} parent=1 // pred_check_branch
      %79 = sbr.rel (0) target = $region29
    $region28: #{tpu_custom_call.1} parent=1 // pred_region
      %s81 = ssub.s32 2048, 2048
      %82 = vsyncadd [#allocation12], %s81
      %s83 = sshll.u32 [#allocation11], 4
      %s84 = int_to_ptr.vmem [resolvable:$true] %s83
      %89 = dma.hbm_to_vmem [thread:$0]  %s6, 2048, %s84, [#allocation12], 128, 128, 8
    $region29: #{tpu_custom_call.1} parent=1 // pred_fallthru
      _
    // Predicated region
    $region30: #{tpu_custom_call.1} parent=1 // pred_check
      _
    $region31: #{tpu_custom_call.1} parent=1 // pred_check_branch
      %91 = sbr.rel (0) target = $region33
    $region32: #{tpu_custom_call.1} parent=1 // pred_region
      _
    $region33: #{tpu_custom_call.1} parent=1 // pred_fallthru
      _
    // Predicated region
    $region34: #{tpu_custom_call.1} parent=1 // pred_check
      _
    $region35: #{tpu_custom_call.1} parent=1 // pred_check_branch
      %93 = sbr.rel (0) target = $region37
    $region36: #{tpu_custom_call.1} parent=1 // pred_region
      %94 = dma.done [#allocation3], 448
    $region37: #{tpu_custom_call.1} parent=1 // pred_fallthru
      _
    // Predicated region
    $region38: #{tpu_custom_call.1} parent=1 // pred_check
      _
    $region39: #{tpu_custom_call.1} parent=1 // pred_check_branch
      %96 = sbr.rel (0) target = $region41
    $region40: #{tpu_custom_call.1} parent=1 // pred_region
      %97 = dma.done [#allocation6], 21504
    $region41: #{tpu_custom_call.1} parent=1 // pred_fallthru
      _
    // Predicated region
    $region42: #{tpu_custom_call.1} parent=1 // pred_check
      _
    $region43: #{tpu_custom_call.1} parent=1 // pred_check_branch
      %99 = sbr.rel (0) target = $region45
    $region44: #{tpu_custom_call.1} parent=1 // pred_region
      %100 = dma.done [#allocation6], 6144
    $region45: #{tpu_custom_call.1} parent=1 // pred_fallthru
      _
    // Predicated region
    $region46: #{tpu_custom_call.1} parent=1 // pred_check
      _
    $region47: #{tpu_custom_call.1} parent=1 // pred_check_branch
      %102 = sbr.rel (0) target = $region49
    $region48: #{tpu_custom_call.1} parent=1 // pred_region
      %103 = dma.done [#allocation9], 2048
    $region49: #{tpu_custom_call.1} parent=1 // pred_fallthru
      _
    // Predicated region
    $region50: #{tpu_custom_call.1} parent=1 // pred_check
      _
    $region51: #{tpu_custom_call.1} parent=1 // pred_check_branch
      %105 = sbr.rel (0) target = $region53
    $region52: #{tpu_custom_call.1} parent=1 // pred_region
      %106 = dma.done [#allocation9], 2048
    $region53: #{tpu_custom_call.1} parent=1 // pred_fallthru
      _
    // Predicated region
    $region54: #{tpu_custom_call.1} parent=1 // pred_check
      _
    $region55: #{tpu_custom_call.1} parent=1 // pred_check_branch
      %108 = sbr.rel (0) target = $region57
    $region56: #{tpu_custom_call.1} parent=1 // pred_region
      %109 = dma.done [#allocation12], 2048
    $region57: #{tpu_custom_call.1} parent=1 // pred_fallthru
      _
    %v111 = vld [vmem:[#allocation2] sm:$0xff]
    %v112 = vld [vmem:[#allocation2 + $0x8] sm:$0xff]
    %v113 = vld [vmem:[#allocation2 + $0x10] sm:$0xff]
    %v114 = vld [vmem:[#allocation2 + $0x18] sm:$0xf]
    %v115 = vld [vmem:[#allocation5] sm:$0xff]
    %v116 = vld [vmem:[#allocation5 + $0x8] sm:$0xf]
    %v117 = vld [vmem:[#allocation5 + $0xc] sm:$0xff]
    %v118 = vld [vmem:[#allocation5 + $0x14] sm:$0xf]
    %v119 = vld [vmem:[#allocation5 + $0x18] sm:$0xff]
    %v120 = vld [vmem:[#allocation5 + $0x20] sm:$0xf]
    %v121 = vld [vmem:[#allocation5 + $0x24] sm:$0xff]
    %v122 = vld [vmem:[#allocation5 + $0x2c] sm:$0xf]
    %v123 = vld [vmem:[#allocation5 + $0x30] sm:$0xff]
    %v124 = vld [vmem:[#allocation5 + $0x38] sm:$0xf]
    %v125 = vld [vmem:[#allocation5 + $0x3c] sm:$0xff]
    %v126 = vld [vmem:[#allocation5 + $0x44] sm:$0xf]
    %v127 = vld [vmem:[#allocation5 + $0x48] sm:$0xff]
    %v128 = vld [vmem:[#allocation5 + $0x50] sm:$0xf]
    %v129 = vld [vmem:[#allocation5 + $0x54] sm:$0xff]
    %v130 = vld [vmem:[#allocation5 + $0x5c] sm:$0xf]
    %v131 = vld [vmem:[#allocation5 + $0x60] sm:$0xff]
    %v132 = vld [vmem:[#allocation5 + $0x68] sm:$0xf]
    %v133 = vld [vmem:[#allocation5 + $0x6c] sm:$0xff]
    %v134 = vld [vmem:[#allocation5 + $0x74] sm:$0xf]
    %v135 = vld [vmem:[#allocation5 + $0x78] sm:$0xff]
    %v136 = vld [vmem:[#allocation5 + $0x80] sm:$0xf]
    %v137 = vld [vmem:[#allocation5 + $0x84] sm:$0xff]
    %v138 = vld [vmem:[#allocation5 + $0x8c] sm:$0xf]
    %v139 = vld [vmem:[#allocation5 + $0x90] sm:$0xff]
    %v140 = vld [vmem:[#allocation5 + $0x98] sm:$0xf]
    %v141 = vld [vmem:[#allocation5 + $0x9c] sm:$0xff]
    %v142 = vld [vmem:[#allocation5 + $0xa4] sm:$0xf]
    %v143 = vld [vmem:[#allocation5 + $0xa8] sm:$0xff]
    %v144 = vld [vmem:[#allocation5 + $0xb0] sm:$0xf]
    %v145 = vld [vmem:[#allocation5 + $0xb4] sm:$0xff]
    %v146 = vld [vmem:[#allocation5 + $0xbc] sm:$0xf]
    %v147 = vld [vmem:[#allocation5 + $0xc0] sm:$0xff]
    %v148 = vld [vmem:[#allocation5 + $0xc8] sm:$0xf]
    %v149 = vld [vmem:[#allocation5 + $0xcc] sm:$0xff]
    %v150 = vld [vmem:[#allocation5 + $0xd4] sm:$0xf]
    %v151 = vld [vmem:[#allocation5 + $0xd8] sm:$0xff]
    %v152 = vld [vmem:[#allocation5 + $0xe0] sm:$0xf]
    %v153 = vld [vmem:[#allocation5 + $0xe4] sm:$0xff]
    %v154 = vld [vmem:[#allocation5 + $0xec] sm:$0xf]
    %v155 = vld [vmem:[#allocation5 + $0xf0] sm:$0xff]
    %v156 = vld [vmem:[#allocation5 + $0xf8] sm:$0xf]
    %v157 = vld [vmem:[#allocation5 + $0xfc] sm:$0xff]
    %v158 = vld [vmem:[#allocation5 + $0x104] sm:$0xf]
    %v159 = vld [vmem:[#allocation5 + $0x108] sm:$0xff]
    %v160 = vld [vmem:[#allocation5 + $0x110] sm:$0xf]
    %v161 = vld [vmem:[#allocation5 + $0x114] sm:$0xff]
    %v162 = vld [vmem:[#allocation5 + $0x11c] sm:$0xf]
    %v163 = vld [vmem:[#allocation5 + $0x120] sm:$0xff]
    %v164 = vld [vmem:[#allocation5 + $0x128] sm:$0xf]
    %v165 = vld [vmem:[#allocation5 + $0x12c] sm:$0xff]
    %v166 = vld [vmem:[#allocation5 + $0x134] sm:$0xf]
    %v167 = vld [vmem:[#allocation5 + $0x138] sm:$0xff]
    %v168 = vld [vmem:[#allocation5 + $0x140] sm:$0xf]
    %v169 = vld [vmem:[#allocation5 + $0x144] sm:$0xff]
    %v170 = vld [vmem:[#allocation5 + $0x14c] sm:$0xf]
    %v171 = vld [vmem:[#allocation5 + $0x150] sm:$0xff]
    %v172 = vld [vmem:[#allocation5 + $0x158] sm:$0xf]
    %v173 = vld [vmem:[#allocation5 + $0x15c] sm:$0xff]
    %v174 = vld [vmem:[#allocation5 + $0x164] sm:$0xf]
    %v175 = vld [vmem:[#allocation5 + $0x168] sm:$0xff]
    %v176 = vld [vmem:[#allocation5 + $0x170] sm:$0xf]
    %v177 = vld [vmem:[#allocation5 + $0x174] sm:$0xff]
    %v178 = vld [vmem:[#allocation5 + $0x17c] sm:$0xf]
    %v179 = vld [vmem:[#allocation5 + $0x180] sm:$0xff]
    %v180 = vld [vmem:[#allocation5 + $0x188] sm:$0xf]
    %v181 = vld [vmem:[#allocation5 + $0x18c] sm:$0xff]
    %v182 = vld [vmem:[#allocation5 + $0x194] sm:$0xf]
    %v183 = vld [vmem:[#allocation5 + $0x198] sm:$0xff]
    %v184 = vld [vmem:[#allocation5 + $0x1a0] sm:$0xf]
    %v185 = vld [vmem:[#allocation5 + $0x1a4] sm:$0xff]
    %v186 = vld [vmem:[#allocation5 + $0x1ac] sm:$0xf]
    %v187 = vld [vmem:[#allocation5 + $0x1b0] sm:$0xff]
    %v188 = vld [vmem:[#allocation5 + $0x1b8] sm:$0xf]
    %v189 = vld [vmem:[#allocation5 + $0x1bc] sm:$0xff]
    %v190 = vld [vmem:[#allocation5 + $0x1c4] sm:$0xf]
    %v191 = vld [vmem:[#allocation5 + $0x1c8] sm:$0xff]
    %v192 = vld [vmem:[#allocation5 + $0x1d0] sm:$0xf]
    %v193 = vld [vmem:[#allocation5 + $0x1d4] sm:$0xff]
    %v194 = vld [vmem:[#allocation5 + $0x1dc] sm:$0xf]
    %v195 = vld [vmem:[#allocation5 + $0x1e0] sm:$0xff]
    %v196 = vld [vmem:[#allocation5 + $0x1e8] sm:$0xf]
    %v197 = vld [vmem:[#allocation5 + $0x1ec] sm:$0xff]
    %v198 = vld [vmem:[#allocation5 + $0x1f4] sm:$0xf]
    %v199 = vld [vmem:[#allocation5 + $0x1f8] sm:$0xff]
    %v200 = vld [vmem:[#allocation5 + $0x200] sm:$0xf]
    %v201 = vld [vmem:[#allocation5 + $0x204] sm:$0xff]
    %v202 = vld [vmem:[#allocation5 + $0x20c] sm:$0xf]
    %v203 = vld [vmem:[#allocation5 + $0x210] sm:$0xff]
    %v204 = vld [vmem:[#allocation5 + $0x218] sm:$0xf]
    %v205 = vld [vmem:[#allocation5 + $0x21c] sm:$0xff]
    %v206 = vld [vmem:[#allocation5 + $0x224] sm:$0xf]
    %v207 = vld [vmem:[#allocation5 + $0x228] sm:$0xff]
    %v208 = vld [vmem:[#allocation5 + $0x230] sm:$0xf]
    %v209 = vld [vmem:[#allocation5 + $0x234] sm:$0xff]
    %v210 = vld [vmem:[#allocation5 + $0x23c] sm:$0xf]
    %v211 = vld [vmem:[#allocation5 + $0x240] sm:$0xff]
    %v212 = vld [vmem:[#allocation5 + $0x248] sm:$0xf]
    %v213 = vld [vmem:[#allocation5 + $0x24c] sm:$0xff]
    %v214 = vld [vmem:[#allocation5 + $0x254] sm:$0xf]
    %v215 = vld [vmem:[#allocation5 + $0x258] sm:$0xff]
    %v216 = vld [vmem:[#allocation5 + $0x260] sm:$0xf]
    %v217 = vld [vmem:[#allocation5 + $0x264] sm:$0xff]
    %v218 = vld [vmem:[#allocation5 + $0x26c] sm:$0xf]
    %v219 = vld [vmem:[#allocation5 + $0x270] sm:$0xff]
    %v220 = vld [vmem:[#allocation5 + $0x278] sm:$0xf]
    %v221 = vld [vmem:[#allocation5 + $0x27c] sm:$0xff]
    %v222 = vld [vmem:[#allocation5 + $0x284] sm:$0xf]
    %v223 = vld [vmem:[#allocation5 + $0x288] sm:$0xff]
    %v224 = vld [vmem:[#allocation5 + $0x290] sm:$0xf]
    %v225 = vld [vmem:[#allocation5 + $0x294] sm:$0xff]
    %v226 = vld [vmem:[#allocation5 + $0x29c] sm:$0xf]
    %v227 = vld [vmem:[#allocation5 + $0x2a0] sm:$0xff]
    %v228 = vld [vmem:[#allocation5 + $0x2a8] sm:$0xf]
    %v229 = vld [vmem:[#allocation5 + $0x2ac] sm:$0xff]
    %v230 = vld [vmem:[#allocation5 + $0x2b4] sm:$0xf]
    %v231 = vld [vmem:[#allocation5 + $0x2b8] sm:$0xff]
    %v232 = vld [vmem:[#allocation5 + $0x2c0] sm:$0xf]
    %v233 = vld [vmem:[#allocation5 + $0x2c4] sm:$0xff]
    %v234 = vld [vmem:[#allocation5 + $0x2cc] sm:$0xf]
    %v235 = vld [vmem:[#allocation5 + $0x2d0] sm:$0xff]
    %v236 = vld [vmem:[#allocation5 + $0x2d8] sm:$0xf]
    %v237 = vld [vmem:[#allocation5 + $0x2dc] sm:$0xff]
    %v238 = vld [vmem:[#allocation5 + $0x2e4] sm:$0xf]
    %v239 = vld [vmem:[#allocation5 + $0x2e8] sm:$0xff]
    %v240 = vld [vmem:[#allocation5 + $0x2f0] sm:$0xf]
    %v241 = vld [vmem:[#allocation5 + $0x2f4] sm:$0xff]
    %v242 = vld [vmem:[#allocation5 + $0x2fc] sm:$0xf]
    %v243 = vld [vmem:[#allocation5 + $0x300] sm:$0xff]
    %v244 = vld [vmem:[#allocation5 + $0x308] sm:$0xf]
    %v245 = vld [vmem:[#allocation5 + $0x30c] sm:$0xff]
    %v246 = vld [vmem:[#allocation5 + $0x314] sm:$0xf]
    %v247 = vld [vmem:[#allocation5 + $0x318] sm:$0xff]
    %v248 = vld [vmem:[#allocation5 + $0x320] sm:$0xf]
    %v249 = vld [vmem:[#allocation5 + $0x324] sm:$0xff]
    %v250 = vld [vmem:[#allocation5 + $0x32c] sm:$0xf]
    %v251 = vld [vmem:[#allocation5 + $0x330] sm:$0xff]
    %v252 = vld [vmem:[#allocation5 + $0x338] sm:$0xf]
    %v253 = vld [vmem:[#allocation5 + $0x33c] sm:$0xff]
    %v254 = vld [vmem:[#allocation5 + $0x344] sm:$0xf]
    %v255 = vld [vmem:[#allocation5 + $0x348] sm:$0xff]
    %v256 = vld [vmem:[#allocation5 + $0x350] sm:$0xf]
    %v257 = vld [vmem:[#allocation5 + $0x354] sm:$0xff]
    %v258 = vld [vmem:[#allocation5 + $0x35c] sm:$0xf]
    %v259 = vld [vmem:[#allocation5 + $0x360] sm:$0xff]
    %v260 = vld [vmem:[#allocation5 + $0x368] sm:$0xf]
    %v261 = vld [vmem:[#allocation5 + $0x36c] sm:$0xff]
    %v262 = vld [vmem:[#allocation5 + $0x374] sm:$0xf]
    %v263 = vld [vmem:[#allocation5 + $0x378] sm:$0xff]
    %v264 = vld [vmem:[#allocation5 + $0x380] sm:$0xf]
    %v265 = vld [vmem:[#allocation5 + $0x384] sm:$0xff]
    %v266 = vld [vmem:[#allocation5 + $0x38c] sm:$0xf]
    %v267 = vld [vmem:[#allocation5 + $0x390] sm:$0xff]
    %v268 = vld [vmem:[#allocation5 + $0x398] sm:$0xf]
    %v269 = vld [vmem:[#allocation5 + $0x39c] sm:$0xff]
    %v270 = vld [vmem:[#allocation5 + $0x3a4] sm:$0xf]
    %v271 = vld [vmem:[#allocation5 + $0x3a8] sm:$0xff]
    %v272 = vld [vmem:[#allocation5 + $0x3b0] sm:$0xf]
    %v273 = vld [vmem:[#allocation5 + $0x3b4] sm:$0xff]
    %v274 = vld [vmem:[#allocation5 + $0x3bc] sm:$0xf]
    %v275 = vld [vmem:[#allocation5 + $0x3c0] sm:$0xff]
    %v276 = vld [vmem:[#allocation5 + $0x3c8] sm:$0xf]
    %v277 = vld [vmem:[#allocation5 + $0x3cc] sm:$0xff]
    %v278 = vld [vmem:[#allocation5 + $0x3d4] sm:$0xf]
    %v279 = vld [vmem:[#allocation5 + $0x3d8] sm:$0xff]
    %v280 = vld [vmem:[#allocation5 + $0x3e0] sm:$0xf]
    %v281 = vld [vmem:[#allocation5 + $0x3e4] sm:$0xff]
    %v282 = vld [vmem:[#allocation5 + $0x3ec] sm:$0xf]
    %v283 = vld [vmem:[#allocation5 + $0x3f0] sm:$0xff]
    %v284 = vld [vmem:[#allocation5 + $0x3f8] sm:$0xf]
    %v285 = vld [vmem:[#allocation5 + $0x3fc] sm:$0xff]
    %v286 = vld [vmem:[#allocation5 + $0x404] sm:$0xf]
    %v287 = vld [vmem:[#allocation5 + $0x408] sm:$0xff]
    %v288 = vld [vmem:[#allocation5 + $0x410] sm:$0xf]
    %v289 = vld [vmem:[#allocation5 + $0x414] sm:$0xff]
    %v290 = vld [vmem:[#allocation5 + $0x41c] sm:$0xf]
    %v291 = vld [vmem:[#allocation5 + $0x420] sm:$0xff]
    %v292 = vld [vmem:[#allocation5 + $0x428] sm:$0xf]
    %v293 = vld [vmem:[#allocation5 + $0x42c] sm:$0xff]
    %v294 = vld [vmem:[#allocation5 + $0x434] sm:$0xf]
    %v295 = vld [vmem:[#allocation5 + $0x438] sm:$0xff]
    %v296 = vld [vmem:[#allocation5 + $0x440] sm:$0xf]
    %v297 = vld [vmem:[#allocation5 + $0x444] sm:$0xff]
    %v298 = vld [vmem:[#allocation5 + $0x44c] sm:$0xf]
    %v299 = vld [vmem:[#allocation5 + $0x450] sm:$0xff]
    %v300 = vld [vmem:[#allocation5 + $0x458] sm:$0xf]
    %v301 = vld [vmem:[#allocation5 + $0x45c] sm:$0xff]
    %v302 = vld [vmem:[#allocation5 + $0x464] sm:$0xf]
    %v303 = vld [vmem:[#allocation5 + $0x468] sm:$0xff]
    %v304 = vld [vmem:[#allocation5 + $0x470] sm:$0xf]
    %v305 = vld [vmem:[#allocation5 + $0x474] sm:$0xff]
    %v306 = vld [vmem:[#allocation5 + $0x47c] sm:$0xf]
    %v307 = vld [vmem:[#allocation5 + $0x480] sm:$0xff]
    %v308 = vld [vmem:[#allocation5 + $0x488] sm:$0xf]
    %v309 = vld [vmem:[#allocation5 + $0x48c] sm:$0xff]
    %v310 = vld [vmem:[#allocation5 + $0x494] sm:$0xf]
    %v311 = vld [vmem:[#allocation5 + $0x498] sm:$0xff]
    %v312 = vld [vmem:[#allocation5 + $0x4a0] sm:$0xf]
    %v313 = vld [vmem:[#allocation5 + $0x4a4] sm:$0xff]
    %v314 = vld [vmem:[#allocation5 + $0x4ac] sm:$0xf]
    %v315 = vld [vmem:[#allocation5 + $0x4b0] sm:$0xff]
    %v316 = vld [vmem:[#allocation5 + $0x4b8] sm:$0xf]
    %v317 = vld [vmem:[#allocation5 + $0x4bc] sm:$0xff]
    %v318 = vld [vmem:[#allocation5 + $0x4c4] sm:$0xf]
    %v319 = vld [vmem:[#allocation5 + $0x4c8] sm:$0xff]
    %v320 = vld [vmem:[#allocation5 + $0x4d0] sm:$0xf]
    %v321 = vld [vmem:[#allocation5 + $0x4d4] sm:$0xff]
    %v322 = vld [vmem:[#allocation5 + $0x4dc] sm:$0xf]
    %v323 = vld [vmem:[#allocation5 + $0x4e0] sm:$0xff]
    %v324 = vld [vmem:[#allocation5 + $0x4e8] sm:$0xf]
    %v325 = vld [vmem:[#allocation5 + $0x4ec] sm:$0xff]
    %v326 = vld [vmem:[#allocation5 + $0x4f4] sm:$0xf]
    %v327 = vld [vmem:[#allocation5 + $0x4f8] sm:$0xff]
    %v328 = vld [vmem:[#allocation5 + $0x500] sm:$0xf]
    %v329 = vld [vmem:[#allocation5 + $0x504] sm:$0xff]
    %v330 = vld [vmem:[#allocation5 + $0x50c] sm:$0xf]
    %v331 = vld [vmem:[#allocation5 + $0x510] sm:$0xff]
    %v332 = vld [vmem:[#allocation5 + $0x518] sm:$0xf]
    %v333 = vld [vmem:[#allocation5 + $0x51c] sm:$0xff]
    %v334 = vld [vmem:[#allocation5 + $0x524] sm:$0xf]
    %v335 = vld [vmem:[#allocation5 + $0x528] sm:$0xff]
    %v336 = vld [vmem:[#allocation5 + $0x530] sm:$0xf]
    %v337 = vld [vmem:[#allocation5 + $0x534] sm:$0xff]
    %v338 = vld [vmem:[#allocation5 + $0x53c] sm:$0xf]
    %v343 = vunpack.c.l.b16 %v111
    %v344 = vunpack.c.h.b16 %v111
    %v345 = vunpack.c.l.b16 %v112
    %v346 = vunpack.c.h.b16 %v112
    %v347 = vunpack.c.l.b16 %v113
    %v348 = vunpack.c.h.b16 %v113
    %v349 = vunpack.c.l.b16 %v114
    %v350 = vpack.c.b16 %v343, %v343
    %v351 = vpack.c.b16 %v344, %v344
    %v352 = vpack.c.b16 %v345, %v345
    %v353 = vpack.c.b16 %v346, %v346
    %v354 = vpack.c.b16 %v347, %v347
    %v355 = vpack.c.b16 %v348, %v348
    %v356 = vpack.c.b16 %v349, %v349
    %v588 = vunpack.c.l.b16 %v115
    %v589 = vunpack.c.h.b16 %v115
    %v590 = vunpack.c.l.b16 %v116
    %v591 = vunpack.c.l.b16 %v117
    %v592 = vunpack.c.h.b16 %v117
    %v593 = vunpack.c.l.b16 %v118
    %v594 = vunpack.c.l.b16 %v119
    %v595 = vunpack.c.h.b16 %v119
    %v596 = vunpack.c.l.b16 %v120
    %v597 = vunpack.c.l.b16 %v121
    %v598 = vunpack.c.h.b16 %v121
    %v599 = vunpack.c.l.b16 %v122
    %v600 = vunpack.c.l.b16 %v123
    %v601 = vunpack.c.h.b16 %v123
    %v602 = vunpack.c.l.b16 %v124
    %v603 = vunpack.c.l.b16 %v125
    %v604 = vunpack.c.h.b16 %v125
    %v605 = vunpack.c.l.b16 %v126
    %v606 = vunpack.c.l.b16 %v127
    %v607 = vunpack.c.h.b16 %v127
    %v608 = vunpack.c.l.b16 %v128
    %v609 = vunpack.c.l.b16 %v129
    %v610 = vunpack.c.h.b16 %v129
    %v611 = vunpack.c.l.b16 %v130
    %v612 = vunpack.c.l.b16 %v131
    %v613 = vunpack.c.h.b16 %v131
    %v614 = vunpack.c.l.b16 %v132
    %v615 = vunpack.c.l.b16 %v133
    %v616 = vunpack.c.h.b16 %v133
    %v617 = vunpack.c.l.b16 %v134
    %v618 = vunpack.c.l.b16 %v135
    %v619 = vunpack.c.h.b16 %v135
    %v620 = vunpack.c.l.b16 %v136
    %v621 = vunpack.c.l.b16 %v137
    %v622 = vunpack.c.h.b16 %v137
    %v623 = vunpack.c.l.b16 %v138
    %v624 = vunpack.c.l.b16 %v139
    %v625 = vunpack.c.h.b16 %v139
    %v626 = vunpack.c.l.b16 %v140
    %v627 = vunpack.c.l.b16 %v141
    %v628 = vunpack.c.h.b16 %v141
    %v629 = vunpack.c.l.b16 %v142
    %v630 = vunpack.c.l.b16 %v143
    %v631 = vunpack.c.h.b16 %v143
    %v632 = vunpack.c.l.b16 %v144
    %v633 = vunpack.c.l.b16 %v145
    %v634 = vunpack.c.h.b16 %v145
    %v635 = vunpack.c.l.b16 %v146
    %v636 = vunpack.c.l.b16 %v147
    %v637 = vunpack.c.h.b16 %v147
    %v638 = vunpack.c.l.b16 %v148
    %v639 = vunpack.c.l.b16 %v149
    %v640 = vunpack.c.h.b16 %v149
    %v641 = vunpack.c.l.b16 %v150
    %v642 = vunpack.c.l.b16 %v151
    %v643 = vunpack.c.h.b16 %v151
    %v644 = vunpack.c.l.b16 %v152
    %v645 = vunpack.c.l.b16 %v153
    %v646 = vunpack.c.h.b16 %v153
    %v647 = vunpack.c.l.b16 %v154
    %v648 = vunpack.c.l.b16 %v155
    %v649 = vunpack.c.h.b16 %v155
    %v650 = vunpack.c.l.b16 %v156
    %v651 = vunpack.c.l.b16 %v157
    %v652 = vunpack.c.h.b16 %v157
    %v653 = vunpack.c.l.b16 %v158
    %v654 = vunpack.c.l.b16 %v159
    %v655 = vunpack.c.h.b16 %v159
    %v656 = vunpack.c.l.b16 %v160
    %v657 = vunpack.c.l.b16 %v161
    %v658 = vunpack.c.h.b16 %v161
    %v659 = vunpack.c.l.b16 %v162
    %v660 = vunpack.c.l.b16 %v163
    %v661 = vunpack.c.h.b16 %v163
    %v662 = vunpack.c.l.b16 %v164
    %v663 = vunpack.c.l.b16 %v165
    %v664 = vunpack.c.h.b16 %v165
    %v665 = vunpack.c.l.b16 %v166
    %v666 = vunpack.c.l.b16 %v167
    %v667 = vunpack.c.h.b16 %v167
    %v668 = vunpack.c.l.b16 %v168
    %v669 = vunpack.c.l.b16 %v169
    %v670 = vunpack.c.h.b16 %v169
    %v671 = vunpack.c.l.b16 %v170
    %v672 = vunpack.c.l.b16 %v171
    %v673 = vunpack.c.h.b16 %v171
    %v674 = vunpack.c.l.b16 %v172
    %v675 = vunpack.c.l.b16 %v173
    %v676 = vunpack.c.h.b16 %v173
    %v677 = vunpack.c.l.b16 %v174
    %v678 = vunpack.c.l.b16 %v175
    %v679 = vunpack.c.h.b16 %v175
    %v680 = vunpack.c.l.b16 %v176
    %v681 = vunpack.c.l.b16 %v177
    %v682 = vunpack.c.h.b16 %v177
    %v683 = vunpack.c.l.b16 %v178
    %v684 = vunpack.c.l.b16 %v179
    %v685 = vunpack.c.h.b16 %v179
    %v686 = vunpack.c.l.b16 %v180
    %v687 = vunpack.c.l.b16 %v181
    %v688 = vunpack.c.h.b16 %v181
    %v689 = vunpack.c.l.b16 %v182
    %v690 = vunpack.c.l.b16 %v183
    %v691 = vunpack.c.h.b16 %v183
    %v692 = vunpack.c.l.b16 %v184
    %v693 = vunpack.c.l.b16 %v185
    %v694 = vunpack.c.h.b16 %v185
    %v695 = vunpack.c.l.b16 %v186
    %v696 = vunpack.c.l.b16 %v187
    %v697 = vunpack.c.h.b16 %v187
    %v698 = vunpack.c.l.b16 %v188
    %v699 = vunpack.c.l.b16 %v189
    %v700 = vunpack.c.h.b16 %v189
    %v701 = vunpack.c.l.b16 %v190
    %v702 = vunpack.c.l.b16 %v191
    %v703 = vunpack.c.h.b16 %v191
    %v704 = vunpack.c.l.b16 %v192
    %v705 = vunpack.c.l.b16 %v193
    %v706 = vunpack.c.h.b16 %v193
    %v707 = vunpack.c.l.b16 %v194
    %v708 = vunpack.c.l.b16 %v195
    %v709 = vunpack.c.h.b16 %v195
    %v710 = vunpack.c.l.b16 %v196
    %v711 = vunpack.c.l.b16 %v197
    %v712 = vunpack.c.h.b16 %v197
    %v713 = vunpack.c.l.b16 %v198
    %v714 = vunpack.c.l.b16 %v199
    %v715 = vunpack.c.h.b16 %v199
    %v716 = vunpack.c.l.b16 %v200
    %v717 = vunpack.c.l.b16 %v201
    %v718 = vunpack.c.h.b16 %v201
    %v719 = vunpack.c.l.b16 %v202
    %v720 = vunpack.c.l.b16 %v203
    %v721 = vunpack.c.h.b16 %v203
    %v722 = vunpack.c.l.b16 %v204
    %v723 = vunpack.c.l.b16 %v205
    %v724 = vunpack.c.h.b16 %v205
    %v725 = vunpack.c.l.b16 %v206
    %v726 = vunpack.c.l.b16 %v207
    %v727 = vunpack.c.h.b16 %v207
    %v728 = vunpack.c.l.b16 %v208
    %v729 = vunpack.c.l.b16 %v209
    %v730 = vunpack.c.h.b16 %v209
    %v731 = vunpack.c.l.b16 %v210
    %v732 = vunpack.c.l.b16 %v211
    %v733 = vunpack.c.h.b16 %v211
    %v734 = vunpack.c.l.b16 %v212
    %v735 = vunpack.c.l.b16 %v213
    %v736 = vunpack.c.h.b16 %v213
    %v737 = vunpack.c.l.b16 %v214
    %v738 = vunpack.c.l.b16 %v215
    %v739 = vunpack.c.h.b16 %v215
    %v740 = vunpack.c.l.b16 %v216
    %v741 = vunpack.c.l.b16 %v217
    %v742 = vunpack.c.h.b16 %v217
    %v743 = vunpack.c.l.b16 %v218
    %v744 = vunpack.c.l.b16 %v219
    %v745 = vunpack.c.h.b16 %v219
    %v746 = vunpack.c.l.b16 %v220
    %v747 = vunpack.c.l.b16 %v221
    %v748 = vunpack.c.h.b16 %v221
    %v749 = vunpack.c.l.b16 %v222
    %v750 = vunpack.c.l.b16 %v223
    %v751 = vunpack.c.h.b16 %v223
    %v752 = vunpack.c.l.b16 %v224
    %v753 = vunpack.c.l.b16 %v225
    %v754 = vunpack.c.h.b16 %v225
    %v755 = vunpack.c.l.b16 %v226
    %v756 = vunpack.c.l.b16 %v227
    %v757 = vunpack.c.h.b16 %v227
    %v758 = vunpack.c.l.b16 %v228
    %v759 = vunpack.c.l.b16 %v229
    %v760 = vunpack.c.h.b16 %v229
    %v761 = vunpack.c.l.b16 %v230
    %v762 = vunpack.c.l.b16 %v231
    %v763 = vunpack.c.h.b16 %v231
    %v764 = vunpack.c.l.b16 %v232
    %v765 = vunpack.c.l.b16 %v233
    %v766 = vunpack.c.h.b16 %v233
    %v767 = vunpack.c.l.b16 %v234
    %v768 = vunpack.c.l.b16 %v235
    %v769 = vunpack.c.h.b16 %v235
    %v770 = vunpack.c.l.b16 %v236
    %v771 = vunpack.c.l.b16 %v237
    %v772 = vunpack.c.h.b16 %v237
    %v773 = vunpack.c.l.b16 %v238
    %v774 = vunpack.c.l.b16 %v239
    %v775 = vunpack.c.h.b16 %v239
    %v776 = vunpack.c.l.b16 %v240
    %v777 = vunpack.c.l.b16 %v241
    %v778 = vunpack.c.h.b16 %v241
    %v779 = vunpack.c.l.b16 %v242
    %v780 = vunpack.c.l.b16 %v243
    %v781 = vunpack.c.h.b16 %v243
    %v782 = vunpack.c.l.b16 %v244
    %v783 = vunpack.c.l.b16 %v245
    %v784 = vunpack.c.h.b16 %v245
    %v785 = vunpack.c.l.b16 %v246
    %v786 = vunpack.c.l.b16 %v247
    %v787 = vunpack.c.h.b16 %v247
    %v788 = vunpack.c.l.b16 %v248
    %v789 = vunpack.c.l.b16 %v249
    %v790 = vunpack.c.h.b16 %v249
    %v791 = vunpack.c.l.b16 %v250
    %v792 = vunpack.c.l.b16 %v251
    %v793 = vunpack.c.h.b16 %v251
    %v794 = vunpack.c.l.b16 %v252
    %v795 = vunpack.c.l.b16 %v253
    %v796 = vunpack.c.h.b16 %v253
    %v797 = vunpack.c.l.b16 %v254
    %v798 = vunpack.c.l.b16 %v255
    %v799 = vunpack.c.h.b16 %v255
    %v800 = vunpack.c.l.b16 %v256
    %v801 = vunpack.c.l.b16 %v257
    %v802 = vunpack.c.h.b16 %v257
    %v803 = vunpack.c.l.b16 %v258
    %v804 = vunpack.c.l.b16 %v259
    %v805 = vunpack.c.h.b16 %v259
    %v806 = vunpack.c.l.b16 %v260
    %v807 = vunpack.c.l.b16 %v261
    %v808 = vunpack.c.h.b16 %v261
    %v809 = vunpack.c.l.b16 %v262
    %v810 = vunpack.c.l.b16 %v263
    %v811 = vunpack.c.h.b16 %v263
    %v812 = vunpack.c.l.b16 %v264
    %v813 = vunpack.c.l.b16 %v265
    %v814 = vunpack.c.h.b16 %v265
    %v815 = vunpack.c.l.b16 %v266
    %v816 = vunpack.c.l.b16 %v267
    %v817 = vunpack.c.h.b16 %v267
    %v818 = vunpack.c.l.b16 %v268
    %v819 = vunpack.c.l.b16 %v269
    %v820 = vunpack.c.h.b16 %v269
    %v821 = vunpack.c.l.b16 %v270
    %v822 = vunpack.c.l.b16 %v271
    %v823 = vunpack.c.h.b16 %v271
    %v824 = vunpack.c.l.b16 %v272
    %v825 = vunpack.c.l.b16 %v273
    %v826 = vunpack.c.h.b16 %v273
    %v827 = vunpack.c.l.b16 %v274
    %v828 = vunpack.c.l.b16 %v275
    %v829 = vunpack.c.h.b16 %v275
    %v830 = vunpack.c.l.b16 %v276
    %v831 = vunpack.c.l.b16 %v277
    %v832 = vunpack.c.h.b16 %v277
    %v833 = vunpack.c.l.b16 %v278
    %v834 = vunpack.c.l.b16 %v279
    %v835 = vunpack.c.h.b16 %v279
    %v836 = vunpack.c.l.b16 %v280
    %v837 = vunpack.c.l.b16 %v281
    %v838 = vunpack.c.h.b16 %v281
    %v839 = vunpack.c.l.b16 %v282
    %v840 = vunpack.c.l.b16 %v283
    %v841 = vunpack.c.h.b16 %v283
    %v842 = vunpack.c.l.b16 %v284
    %v843 = vunpack.c.l.b16 %v285
    %v844 = vunpack.c.h.b16 %v285
    %v845 = vunpack.c.l.b16 %v286
    %v846 = vunpack.c.l.b16 %v287
    %v847 = vunpack.c.h.b16 %v287
    %v848 = vunpack.c.l.b16 %v288
    %v849 = vunpack.c.l.b16 %v289
    %v850 = vunpack.c.h.b16 %v289
    %v851 = vunpack.c.l.b16 %v290
    %v852 = vunpack.c.l.b16 %v291
    %v853 = vunpack.c.h.b16 %v291
    %v854 = vunpack.c.l.b16 %v292
    %v855 = vunpack.c.l.b16 %v293
    %v856 = vunpack.c.h.b16 %v293
    %v857 = vunpack.c.l.b16 %v294
    %v858 = vunpack.c.l.b16 %v295
    %v859 = vunpack.c.h.b16 %v295
    %v860 = vunpack.c.l.b16 %v296
    %v861 = vunpack.c.l.b16 %v297
    %v862 = vunpack.c.h.b16 %v297
    %v863 = vunpack.c.l.b16 %v298
    %v864 = vunpack.c.l.b16 %v299
    %v865 = vunpack.c.h.b16 %v299
    %v866 = vunpack.c.l.b16 %v300
    %v867 = vunpack.c.l.b16 %v301
    %v868 = vunpack.c.h.b16 %v301
    %v869 = vunpack.c.l.b16 %v302
    %v870 = vunpack.c.l.b16 %v303
    %v871 = vunpack.c.h.b16 %v303
    %v872 = vunpack.c.l.b16 %v304
    %v873 = vunpack.c.l.b16 %v305
    %v874 = vunpack.c.h.b16 %v305
    %v875 = vunpack.c.l.b16 %v306
    %v876 = vunpack.c.l.b16 %v307
    %v877 = vunpack.c.h.b16 %v307
    %v878 = vunpack.c.l.b16 %v308
    %v879 = vunpack.c.l.b16 %v309
    %v880 = vunpack.c.h.b16 %v309
    %v881 = vunpack.c.l.b16 %v310
    %v882 = vunpack.c.l.b16 %v311
    %v883 = vunpack.c.h.b16 %v311
    %v884 = vunpack.c.l.b16 %v312
    %v885 = vunpack.c.l.b16 %v313
    %v886 = vunpack.c.h.b16 %v313
    %v887 = vunpack.c.l.b16 %v314
    %v888 = vunpack.c.l.b16 %v315
    %v889 = vunpack.c.h.b16 %v315
    %v890 = vunpack.c.l.b16 %v316
    %v891 = vunpack.c.l.b16 %v317
    %v892 = vunpack.c.h.b16 %v317
    %v893 = vunpack.c.l.b16 %v318
    %v894 = vunpack.c.l.b16 %v319
    %v895 = vunpack.c.h.b16 %v319
    %v896 = vunpack.c.l.b16 %v320
    %v897 = vunpack.c.l.b16 %v321
    %v898 = vunpack.c.h.b16 %v321
    %v899 = vunpack.c.l.b16 %v322
    %v900 = vunpack.c.l.b16 %v323
    %v901 = vunpack.c.h.b16 %v323
    %v902 = vunpack.c.l.b16 %v324
    %v903 = vunpack.c.l.b16 %v325
    %v904 = vunpack.c.h.b16 %v325
    %v905 = vunpack.c.l.b16 %v326
    %v906 = vunpack.c.l.b16 %v327
    %v907 = vunpack.c.h.b16 %v327
    %v908 = vunpack.c.l.b16 %v328
    %v909 = vunpack.c.l.b16 %v329
    %v910 = vunpack.c.h.b16 %v329
    %v911 = vunpack.c.l.b16 %v330
    %v912 = vunpack.c.l.b16 %v331
    %v913 = vunpack.c.h.b16 %v331
    %v914 = vunpack.c.l.b16 %v332
    %v915 = vunpack.c.l.b16 %v333
    %v916 = vunpack.c.h.b16 %v333
    %v917 = vunpack.c.l.b16 %v334
    %v918 = vunpack.c.l.b16 %v335
    %v919 = vunpack.c.h.b16 %v335
    %v920 = vunpack.c.l.b16 %v336
    %v921 = vunpack.c.l.b16 %v337
    %v922 = vunpack.c.h.b16 %v337
    %v923 = vunpack.c.l.b16 %v338
    %v924 = vpack.c.b16 %v591, %v588
    %v925 = vpack.c.b16 %v592, %v589
    %v926 = vpack.c.b16 %v593, %v590
    %v927 = vpack.c.b16 %v597, %v594
    %v928 = vpack.c.b16 %v598, %v595
    %v929 = vpack.c.b16 %v599, %v596
    %v930 = vpack.c.b16 %v603, %v600
    %v931 = vpack.c.b16 %v604, %v601
    %v932 = vpack.c.b16 %v605, %v602
    %v933 = vpack.c.b16 %v609, %v606
    %v934 = vpack.c.b16 %v610, %v607
    %v935 = vpack.c.b16 %v611, %v608
    %v936 = vpack.c.b16 %v615, %v612
    %v937 = vpack.c.b16 %v616, %v613
    %v938 = vpack.c.b16 %v617, %v614
    %v939 = vpack.c.b16 %v621, %v618
    %v940 = vpack.c.b16 %v622, %v619
    %v941 = vpack.c.b16 %v623, %v620
    %v942 = vpack.c.b16 %v627, %v624
    %v943 = vpack.c.b16 %v628, %v625
    %v944 = vpack.c.b16 %v629, %v626
    %v945 = vpack.c.b16 %v633, %v630
    %v946 = vpack.c.b16 %v634, %v631
    %v947 = vpack.c.b16 %v635, %v632
    %v948 = vpack.c.b16 %v639, %v636
    %v949 = vpack.c.b16 %v640, %v637
    %v950 = vpack.c.b16 %v641, %v638
    %v951 = vpack.c.b16 %v645, %v642
    %v952 = vpack.c.b16 %v646, %v643
    %v953 = vpack.c.b16 %v647, %v644
    %v954 = vpack.c.b16 %v651, %v648
    %v955 = vpack.c.b16 %v652, %v649
    %v956 = vpack.c.b16 %v653, %v650
    %v957 = vpack.c.b16 %v657, %v654
    %v958 = vpack.c.b16 %v658, %v655
    %v959 = vpack.c.b16 %v659, %v656
    %v960 = vpack.c.b16 %v663, %v660
    %v961 = vpack.c.b16 %v664, %v661
    %v962 = vpack.c.b16 %v665, %v662
    %v963 = vpack.c.b16 %v669, %v666
    %v964 = vpack.c.b16 %v670, %v667
    %v965 = vpack.c.b16 %v671, %v668
    %v966 = vpack.c.b16 %v675, %v672
    %v967 = vpack.c.b16 %v676, %v673
    %v968 = vpack.c.b16 %v677, %v674
    %v969 = vpack.c.b16 %v681, %v678
    %v970 = vpack.c.b16 %v682, %v679
    %v971 = vpack.c.b16 %v683, %v680
    %v972 = vpack.c.b16 %v687, %v684
    %v973 = vpack.c.b16 %v688, %v685
    %v974 = vpack.c.b16 %v689, %v686
    %v975 = vpack.c.b16 %v693, %v690
    %v976 = vpack.c.b16 %v694, %v691
    %v977 = vpack.c.b16 %v695, %v692
    %v978 = vpack.c.b16 %v699, %v696
    %v979 = vpack.c.b16 %v700, %v697
    %v980 = vpack.c.b16 %v701, %v698
    %v981 = vpack.c.b16 %v705, %v702
    %v982 = vpack.c.b16 %v706, %v703
    %v983 = vpack.c.b16 %v707, %v704
    %v984 = vpack.c.b16 %v711, %v708
    %v985 = vpack.c.b16 %v712, %v709
    %v986 = vpack.c.b16 %v713, %v710
    %v987 = vpack.c.b16 %v717, %v714
    %v988 = vpack.c.b16 %v718, %v715
    %v989 = vpack.c.b16 %v719, %v716
    %v990 = vpack.c.b16 %v723, %v720
    %v991 = vpack.c.b16 %v724, %v721
    %v992 = vpack.c.b16 %v725, %v722
    %v993 = vpack.c.b16 %v729, %v726
    %v994 = vpack.c.b16 %v730, %v727
    %v995 = vpack.c.b16 %v731, %v728
    %v996 = vpack.c.b16 %v735, %v732
    %v997 = vpack.c.b16 %v736, %v733
    %v998 = vpack.c.b16 %v737, %v734
    %v999 = vpack.c.b16 %v741, %v738
    %v1000 = vpack.c.b16 %v742, %v739
    %v1001 = vpack.c.b16 %v743, %v740
    %v1002 = vpack.c.b16 %v747, %v744
    %v1003 = vpack.c.b16 %v748, %v745
    %v1004 = vpack.c.b16 %v749, %v746
    %v1005 = vpack.c.b16 %v753, %v750
    %v1006 = vpack.c.b16 %v754, %v751
    %v1007 = vpack.c.b16 %v755, %v752
    %v1008 = vpack.c.b16 %v759, %v756
    %v1009 = vpack.c.b16 %v760, %v757
    %v1010 = vpack.c.b16 %v761, %v758
    %v1011 = vpack.c.b16 %v765, %v762
    %v1012 = vpack.c.b16 %v766, %v763
    %v1013 = vpack.c.b16 %v767, %v764
    %v1014 = vpack.c.b16 %v771, %v768
    %v1015 = vpack.c.b16 %v772, %v769
    %v1016 = vpack.c.b16 %v773, %v770
    %v1017 = vpack.c.b16 %v777, %v774
    %v1018 = vpack.c.b16 %v778, %v775
    %v1019 = vpack.c.b16 %v779, %v776
    %v1020 = vpack.c.b16 %v783, %v780
    %v1021 = vpack.c.b16 %v784, %v781
    %v1022 = vpack.c.b16 %v785, %v782
    %v1023 = vpack.c.b16 %v789, %v786
    %v1024 = vpack.c.b16 %v790, %v787
    %v1025 = vpack.c.b16 %v791, %v788
    %v1026 = vpack.c.b16 %v795, %v792
    %v1027 = vpack.c.b16 %v796, %v793
    %v1028 = vpack.c.b16 %v797, %v794
    %v1029 = vpack.c.b16 %v801, %v798
    %v1030 = vpack.c.b16 %v802, %v799
    %v1031 = vpack.c.b16 %v803, %v800
    %v1032 = vpack.c.b16 %v807, %v804
    %v1033 = vpack.c.b16 %v808, %v805
    %v1034 = vpack.c.b16 %v809, %v806
    %v1035 = vpack.c.b16 %v813, %v810
    %v1036 = vpack.c.b16 %v814, %v811
    %v1037 = vpack.c.b16 %v815, %v812
    %v1038 = vpack.c.b16 %v819, %v816
    %v1039 = vpack.c.b16 %v820, %v817
    %v1040 = vpack.c.b16 %v821, %v818
    %v1041 = vpack.c.b16 %v825, %v822
    %v1042 = vpack.c.b16 %v826, %v823
    %v1043 = vpack.c.b16 %v827, %v824
    %v1044 = vpack.c.b16 %v831, %v828
    %v1045 = vpack.c.b16 %v832, %v829
    %v1046 = vpack.c.b16 %v833, %v830
    %v1047 = vpack.c.b16 %v837, %v834
    %v1048 = vpack.c.b16 %v838, %v835
    %v1049 = vpack.c.b16 %v839, %v836
    %v1050 = vpack.c.b16 %v843, %v840
    %v1051 = vpack.c.b16 %v844, %v841
    %v1052 = vpack.c.b16 %v845, %v842
    %v1053 = vpack.c.b16 %v849, %v846
    %v1054 = vpack.c.b16 %v850, %v847
    %v1055 = vpack.c.b16 %v851, %v848
    %v1056 = vpack.c.b16 %v855, %v852
    %v1057 = vpack.c.b16 %v856, %v853
    %v1058 = vpack.c.b16 %v857, %v854
    %v1059 = vpack.c.b16 %v861, %v858
    %v1060 = vpack.c.b16 %v862, %v859
    %v1061 = vpack.c.b16 %v863, %v860
    %v1062 = vpack.c.b16 %v867, %v864
    %v1063 = vpack.c.b16 %v868, %v865
    %v1064 = vpack.c.b16 %v869, %v866
    %v1065 = vpack.c.b16 %v873, %v870
    %v1066 = vpack.c.b16 %v874, %v871
    %v1067 = vpack.c.b16 %v875, %v872
    %v1068 = vpack.c.b16 %v879, %v876
    %v1069 = vpack.c.b16 %v880, %v877
    %v1070 = vpack.c.b16 %v881, %v878
    %v1071 = vpack.c.b16 %v885, %v882
    %v1072 = vpack.c.b16 %v886, %v883
    %v1073 = vpack.c.b16 %v887, %v884
    %v1074 = vpack.c.b16 %v891, %v888
    %v1075 = vpack.c.b16 %v892, %v889
    %v1076 = vpack.c.b16 %v893, %v890
    %v1077 = vpack.c.b16 %v897, %v894
    %v1078 = vpack.c.b16 %v898, %v895
    %v1079 = vpack.c.b16 %v899, %v896
    %v1080 = vpack.c.b16 %v903, %v900
    %v1081 = vpack.c.b16 %v904, %v901
    %v1082 = vpack.c.b16 %v905, %v902
    %v1083 = vpack.c.b16 %v909, %v906
    %v1084 = vpack.c.b16 %v910, %v907
    %v1085 = vpack.c.b16 %v911, %v908
    %v1086 = vpack.c.b16 %v915, %v912
    %v1087 = vpack.c.b16 %v916, %v913
    %v1088 = vpack.c.b16 %v917, %v914
    %v1089 = vpack.c.b16 %v921, %v918
    %v1090 = vpack.c.b16 %v922, %v919
    %v1091 = vpack.c.b16 %v923, %v920
    %1260 = vmatprep.subr.bf16.mxu0 %v925
    %1261 = vmatpush1.bf16.msra.mxu0 %v924
    %1262 = vmatprep.subr.bf16.mxu0 %v928
    %1263 = vmatpush1.bf16.msra.mxu0 %v927
    %1264 = vmatprep.subr.bf16.mxu0 %v931
    %1265 = vmatpush1.bf16.msra.mxu0 %v930
    %1266 = vmatprep.subr.bf16.mxu0 %v934
    %1267 = vmatpush1.bf16.msra.mxu0 %v933
    %1268 = vmatprep.subr.bf16.mxu0 %v937
    %1269 = vmatpush1.bf16.msra.mxu0 %v936
    %1270 = vmatprep.subr.bf16.mxu0 %v940
    %1271 = vmatpush1.bf16.msra.mxu0 %v939
    %1272 = vmatprep.subr.bf16.mxu0 %v943
    %1273 = vmatpush1.bf16.msra.mxu0 %v942
    %1274 = vmatprep.subr.bf16.mxu0 %v946
    %1275 = vmatpush1.bf16.msra.mxu0 %v945
    %1276 = vmatprep.subr.bf16.mxu0 %v949
    %1277 = vmatpush1.bf16.msra.mxu0 %v948
    %1278 = vmatprep.subr.bf16.mxu0 %v952
    %1279 = vmatpush1.bf16.msra.mxu0 %v951
    %1280 = vmatprep.subr.bf16.mxu0 %v955
    %1281 = vmatpush1.bf16.msra.mxu0 %v954
    %1282 = vmatprep.subr.bf16.mxu0 %v958
    %1283 = vmatpush1.bf16.msra.mxu0 %v957
    %1284 = vmatprep.subr.bf16.mxu0 %v961
    %1285 = vmatpush1.bf16.msra.mxu0 %v960
    %1286 = vmatprep.subr.bf16.mxu0 %v964
    %1287 = vmatpush1.bf16.msra.mxu0 %v963
    %1288 = vmatprep.subr.bf16.mxu0 %v967
    %1289 = vmatpush1.bf16.msra.mxu0 %v966
    %1290 = vmatprep.subr.bf16.mxu0 %v970
    %1291 = vmatpush1.bf16.msra.mxu0 %v969
    %1292 = vmatprep.mubr.bf16.mxu0 %v351
    %1293 = vmatmul.mubr.bf16.gmra.mrb[0].mxu0 %v350
    %v1294 = vpop.f32.mrb[0].mxu0
    %v1295 = vadd.f32 0.0, %v1294
    %v1296 = vpop.f32.mrb[0].mxu0
    %v1297 = vadd.f32 0.0, %v1296
    %v1298 = vpop.f32.mrb[0].mxu0
    %v1299 = vpop.f32.mrb[0].mxu0
    %1300 = vdwg.mxu0
    %1301 = vmatprep.subr.bf16.mxu0 %v973
    %1302 = vmatpush1.bf16.msra.mxu0 %v972
    %1303 = vmatprep.subr.bf16.mxu0 %v976
    %1304 = vmatpush1.bf16.msra.mxu0 %v975
    %1305 = vmatprep.subr.bf16.mxu0 %v979
    %1306 = vmatpush1.bf16.msra.mxu0 %v978
    %1307 = vmatprep.subr.bf16.mxu0 %v982
    %1308 = vmatpush1.bf16.msra.mxu0 %v981
    %1309 = vmatprep.subr.bf16.mxu0 %v985
    %1310 = vmatpush1.bf16.msra.mxu0 %v984
    %1311 = vmatprep.subr.bf16.mxu0 %v988
    %1312 = vmatpush1.bf16.msra.mxu0 %v987
    %1313 = vmatprep.subr.bf16.mxu0 %v991
    %1314 = vmatpush1.bf16.msra.mxu0 %v990
    %1315 = vmatprep.subr.bf16.mxu0 %v994
    %1316 = vmatpush1.bf16.msra.mxu0 %v993
    %1317 = vmatprep.subr.bf16.mxu0 %v997
    %1318 = vmatpush1.bf16.msra.mxu0 %v996
    %1319 = vmatprep.subr.bf16.mxu0 %v1000
    %1320 = vmatpush1.bf16.msra.mxu0 %v999
    %1321 = vmatprep.subr.bf16.mxu0 %v1003
    %1322 = vmatpush1.bf16.msra.mxu0 %v1002
    %1323 = vmatprep.subr.bf16.mxu0 %v1006
    %1324 = vmatpush1.bf16.msra.mxu0 %v1005
    %1325 = vmatprep.subr.bf16.mxu0 %v1009
    %1326 = vmatpush1.bf16.msra.mxu0 %v1008
    %1327 = vmatprep.subr.bf16.mxu0 %v1012
    %1328 = vmatpush1.bf16.msra.mxu0 %v1011
    %1329 = vmatprep.subr.bf16.mxu0 %v1015
    %1330 = vmatpush1.bf16.msra.mxu0 %v1014
    %1331 = vmatprep.subr.bf16.mxu0 %v1018
    %1332 = vmatpush1.bf16.msra.mxu0 %v1017
    %1333 = vmatprep.mubr.bf16.mxu0 %v353
    %1334 = vmatmul.mubr.bf16.gmra.mrb[0].mxu0 %v352
    %v1335 = vpop.f32.mrb[0].mxu0
    %v1336 = vadd.f32 %v1295, %v1335
    %v1337 = vpop.f32.mrb[0].mxu0
    %v1338 = vadd.f32 %v1297, %v1337
    %v1339 = vpop.f32.mrb[0].mxu0
    %v1340 = vpop.f32.mrb[0].mxu0
    %1341 = vdwg.mxu0
    %1342 = vmatprep.subr.bf16.mxu0 %v1021
    %1343 = vmatpush1.bf16.msra.mxu0 %v1020
    %1344 = vmatprep.subr.bf16.mxu0 %v1024
    %1345 = vmatpush1.bf16.msra.mxu0 %v1023
    %1346 = vmatprep.subr.bf16.mxu0 %v1027
    %1347 = vmatpush1.bf16.msra.mxu0 %v1026
    %1348 = vmatprep.subr.bf16.mxu0 %v1030
    %1349 = vmatpush1.bf16.msra.mxu0 %v1029
    %1350 = vmatprep.subr.bf16.mxu0 %v1033
    %1351 = vmatpush1.bf16.msra.mxu0 %v1032
    %1352 = vmatprep.subr.bf16.mxu0 %v1036
    %1353 = vmatpush1.bf16.msra.mxu0 %v1035
    %1354 = vmatprep.subr.bf16.mxu0 %v1039
    %1355 = vmatpush1.bf16.msra.mxu0 %v1038
    %1356 = vmatprep.subr.bf16.mxu0 %v1042
    %1357 = vmatpush1.bf16.msra.mxu0 %v1041
    %1358 = vmatprep.subr.bf16.mxu0 %v1045
    %1359 = vmatpush1.bf16.msra.mxu0 %v1044
    %1360 = vmatprep.subr.bf16.mxu0 %v1048
    %1361 = vmatpush1.bf16.msra.mxu0 %v1047
    %1362 = vmatprep.subr.bf16.mxu0 %v1051
    %1363 = vmatpush1.bf16.msra.mxu0 %v1050
    %1364 = vmatprep.subr.bf16.mxu0 %v1054
    %1365 = vmatpush1.bf16.msra.mxu0 %v1053
    %1366 = vmatprep.subr.bf16.mxu0 %v1057
    %1367 = vmatpush1.bf16.msra.mxu0 %v1056
    %1368 = vmatprep.subr.bf16.mxu0 %v1060
    %1369 = vmatpush1.bf16.msra.mxu0 %v1059
    %1370 = vmatprep.subr.bf16.mxu0 %v1063
    %1371 = vmatpush1.bf16.msra.mxu0 %v1062
    %1372 = vmatprep.subr.bf16.mxu0 %v1066
    %1373 = vmatpush1.bf16.msra.mxu0 %v1065
    %1374 = vmatprep.mubr.bf16.mxu0 %v355
    %1375 = vmatmul.mubr.bf16.gmra.mrb[0].mxu0 %v354
    %v1376 = vpop.f32.mrb[0].mxu0
    %v1377 = vadd.f32 %v1336, %v1376
    %v1378 = vpop.f32.mrb[0].mxu0
    %v1379 = vadd.f32 %v1338, %v1378
    %v1380 = vpop.f32.mrb[0].mxu0
    %v1381 = vpop.f32.mrb[0].mxu0
    %1382 = vdwg.mxu0
    %1383 = vmatprep.subr.bf16.mxu0 %v1069
    %1384 = vmatpush1.bf16.msra.mxu0 %v1068
    %1385 = vmatprep.subr.bf16.mxu0 %v1072
    %1386 = vmatpush1.bf16.msra.mxu0 %v1071
    %1387 = vmatprep.subr.bf16.mxu0 %v1075
    %1388 = vmatpush1.bf16.msra.mxu0 %v1074
    %1389 = vmatprep.subr.bf16.mxu0 %v1078
    %1390 = vmatpush1.bf16.msra.mxu0 %v1077
    %1391 = vmatprep.subr.bf16.mxu0 %v1081
    %1392 = vmatpush1.bf16.msra.mxu0 %v1080
    %1393 = vmatprep.subr.bf16.mxu0 %v1084
    %1394 = vmatpush1.bf16.msra.mxu0 %v1083
    %1395 = vmatprep.subr.bf16.mxu0 %v1087
    %1396 = vmatpush1.bf16.msra.mxu0 %v1086
    %1397 = vmatprep.subr.bf16.mxu0 %v1090
    %1398 = vmatpush1.bf16.msra.mxu0 %v1089
    %1399 = vmatprep.subr.bf16.mxu0 0
    %1400 = vmatpush1.bf16.msra.mxu0 0
    %1401 = vmatprep.subr.bf16.mxu0 0
    %1402 = vmatpush1.bf16.msra.mxu0 0
    %1403 = vmatprep.subr.bf16.mxu0 0
    %1404 = vmatpush1.bf16.msra.mxu0 0
    %1405 = vmatprep.subr.bf16.mxu0 0
    %1406 = vmatpush1.bf16.msra.mxu0 0
    %1407 = vmatprep.subr.bf16.mxu0 0
    %1408 = vmatpush1.bf16.msra.mxu0 0
    %1409 = vmatprep.subr.bf16.mxu0 0
    %1410 = vmatpush1.bf16.msra.mxu0 0
    %1411 = vmatprep.subr.bf16.mxu0 0
    %1412 = vmatpush1.bf16.msra.mxu0 0
    %1413 = vmatprep.subr.bf16.mxu0 0
    %1414 = vmatpush1.bf16.msra.mxu0 0
    %1415 = vmatprep.mubr.bf16.mxu0 0
    %1416 = vmatmul.mubr.bf16.gmra.mrb[0].mxu0 %v356
    %v1417 = vpop.f32.mrb[0].mxu0
    %v1418 = vadd.f32 %v1377, %v1417
    %v1419 = vpop.f32.mrb[0].mxu0
    %v1420 = vadd.f32 %v1379, %v1419
    %v1421 = vpop.f32.mrb[0].mxu0
    %v1422 = vpop.f32.mrb[0].mxu0
    %1423 = vdwg.mxu0
    %1424 = vmatprep.subr.bf16.mxu0 0
    %1425 = vmatpush1.bf16.msra.mxu0 %v926
    %1426 = vmatprep.subr.bf16.mxu0 0
    %1427 = vmatpush1.bf16.msra.mxu0 %v929
    %1428 = vmatprep.subr.bf16.mxu0 0
    %1429 = vmatpush1.bf16.msra.mxu0 %v932
    %1430 = vmatprep.subr.bf16.mxu0 0
    %1431 = vmatpush1.bf16.msra.mxu0 %v935
    %1432 = vmatprep.subr.bf16.mxu0 0
    %1433 = vmatpush1.bf16.msra.mxu0 %v938
    %1434 = vmatprep.subr.bf16.mxu0 0
    %1435 = vmatpush1.bf16.msra.mxu0 %v941
    %1436 = vmatprep.subr.bf16.mxu0 0
    %1437 = vmatpush1.bf16.msra.mxu0 %v944
    %1438 = vmatprep.subr.bf16.mxu0 0
    %1439 = vmatpush1.bf16.msra.mxu0 %v947
    %1440 = vmatprep.subr.bf16.mxu0 0
    %1441 = vmatpush1.bf16.msra.mxu0 %v950
    %1442 = vmatprep.subr.bf16.mxu0 0
    %1443 = vmatpush1.bf16.msra.mxu0 %v953
    %1444 = vmatprep.subr.bf16.mxu0 0
    %1445 = vmatpush1.bf16.msra.mxu0 %v956
    %1446 = vmatprep.subr.bf16.mxu0 0
    %1447 = vmatpush1.bf16.msra.mxu0 %v959
    %1448 = vmatprep.subr.bf16.mxu0 0
    %1449 = vmatpush1.bf16.msra.mxu0 %v962
    %1450 = vmatprep.subr.bf16.mxu0 0
    %1451 = vmatpush1.bf16.msra.mxu0 %v965
    %1452 = vmatprep.subr.bf16.mxu0 0
    %1453 = vmatpush1.bf16.msra.mxu0 %v968
    %1454 = vmatprep.subr.bf16.mxu0 0
    %1455 = vmatpush1.bf16.msra.mxu0 %v971
    %1456 = vmatprep.mubr.bf16.mxu0 %v351
    %1457 = vmatmul.mubr.bf16.gmra.mrb[0].mxu0 %v350
    %v1458 = vpop.f32.mrb[0].mxu0
    %v1459 = vadd.f32 0.0, %v1458
    %v1460 = vpop.f32.mrb[0].mxu0
    %v1461 = vpop.f32.mrb[0].mxu0
    %v1462 = vpop.f32.mrb[0].mxu0
    %1463 = vdwg.mxu0
    %1464 = vmatprep.subr.bf16.mxu0 0
    %1465 = vmatpush1.bf16.msra.mxu0 %v974
    %1466 = vmatprep.subr.bf16.mxu0 0
    %1467 = vmatpush1.bf16.msra.mxu0 %v977
    %1468 = vmatprep.subr.bf16.mxu0 0
    %1469 = vmatpush1.bf16.msra.mxu0 %v980
    %1470 = vmatprep.subr.bf16.mxu0 0
    %1471 = vmatpush1.bf16.msra.mxu0 %v983
    %1472 = vmatprep.subr.bf16.mxu0 0
    %1473 = vmatpush1.bf16.msra.mxu0 %v986
    %1474 = vmatprep.subr.bf16.mxu0 0
    %1475 = vmatpush1.bf16.msra.mxu0 %v989
    %1476 = vmatprep.subr.bf16.mxu0 0
    %1477 = vmatpush1.bf16.msra.mxu0 %v992
    %1478 = vmatprep.subr.bf16.mxu0 0
    %1479 = vmatpush1.bf16.msra.mxu0 %v995
    %1480 = vmatprep.subr.bf16.mxu0 0
    %1481 = vmatpush1.bf16.msra.mxu0 %v998
    %1482 = vmatprep.subr.bf16.mxu0 0
    %1483 = vmatpush1.bf16.msra.mxu0 %v1001
    %1484 = vmatprep.subr.bf16.mxu0 0
    %1485 = vmatpush1.bf16.msra.mxu0 %v1004
    %1486 = vmatprep.subr.bf16.mxu0 0
    %1487 = vmatpush1.bf16.msra.mxu0 %v1007
    %1488 = vmatprep.subr.bf16.mxu0 0
    %1489 = vmatpush1.bf16.msra.mxu0 %v1010
    %1490 = vmatprep.subr.bf16.mxu0 0
    %1491 = vmatpush1.bf16.msra.mxu0 %v1013
    %1492 = vmatprep.subr.bf16.mxu0 0
    %1493 = vmatpush1.bf16.msra.mxu0 %v1016
    %1494 = vmatprep.subr.bf16.mxu0 0
    %1495 = vmatpush1.bf16.msra.mxu0 %v1019
    %1496 = vmatprep.mubr.bf16.mxu0 %v353
    %1497 = vmatmul.mubr.bf16.gmra.mrb[0].mxu0 %v352
    %v1498 = vpop.f32.mrb[0].mxu0
    %v1499 = vadd.f32 %v1459, %v1498
    %v1500 = vpop.f32.mrb[0].mxu0
    %v1501 = vpop.f32.mrb[0].mxu0
    %v1502 = vpop.f32.mrb[0].mxu0
    %1503 = vdwg.mxu0
    %1504 = vmatprep.subr.bf16.mxu0 0
    %1505 = vmatpush1.bf16.msra.mxu0 %v1022
    %1506 = vmatprep.subr.bf16.mxu0 0
    %1507 = vmatpush1.bf16.msra.mxu0 %v1025
    %1508 = vmatprep.subr.bf16.mxu0 0
    %1509 = vmatpush1.bf16.msra.mxu0 %v1028
    %1510 = vmatprep.subr.bf16.mxu0 0
    %1511 = vmatpush1.bf16.msra.mxu0 %v1031
    %1512 = vmatprep.subr.bf16.mxu0 0
    %1513 = vmatpush1.bf16.msra.mxu0 %v1034
    %1514 = vmatprep.subr.bf16.mxu0 0
    %1515 = vmatpush1.bf16.msra.mxu0 %v1037
    %1516 = vmatprep.subr.bf16.mxu0 0
    %1517 = vmatpush1.bf16.msra.mxu0 %v1040
    %1518 = vmatprep.subr.bf16.mxu0 0
    %1519 = vmatpush1.bf16.msra.mxu0 %v1043
    %1520 = vmatprep.subr.bf16.mxu0 0
    %1521 = vmatpush1.bf16.msra.mxu0 %v1046
    %1522 = vmatprep.subr.bf16.mxu0 0
    %1523 = vmatpush1.bf16.msra.mxu0 %v1049
    %1524 = vmatprep.subr.bf16.mxu0 0
    %1525 = vmatpush1.bf16.msra.mxu0 %v1052
    %1526 = vmatprep.subr.bf16.mxu0 0
    %1527 = vmatpush1.bf16.msra.mxu0 %v1055
    %1528 = vmatprep.subr.bf16.mxu0 0
    %1529 = vmatpush1.bf16.msra.mxu0 %v1058
    %1530 = vmatprep.subr.bf16.mxu0 0
    %1531 = vmatpush1.bf16.msra.mxu0 %v1061
    %1532 = vmatprep.subr.bf16.mxu0 0
    %1533 = vmatpush1.bf16.msra.mxu0 %v1064
    %1534 = vmatprep.subr.bf16.mxu0 0
    %1535 = vmatpush1.bf16.msra.mxu0 %v1067
    %1536 = vmatprep.mubr.bf16.mxu0 %v355
    %1537 = vmatmul.mubr.bf16.gmra.mrb[0].mxu0 %v354
    %v1538 = vpop.f32.mrb[0].mxu0
    %v1539 = vadd.f32 %v1499, %v1538
    %v1540 = vpop.f32.mrb[0].mxu0
    %v1541 = vpop.f32.mrb[0].mxu0
    %v1542 = vpop.f32.mrb[0].mxu0
    %1543 = vdwg.mxu0
    %1544 = vmatprep.subr.bf16.mxu0 0
    %1545 = vmatpush1.bf16.msra.mxu0 %v1070
    %1546 = vmatprep.subr.bf16.mxu0 0
    %1547 = vmatpush1.bf16.msra.mxu0 %v1073
    %1548 = vmatprep.subr.bf16.mxu0 0
    %1549 = vmatpush1.bf16.msra.mxu0 %v1076
    %1550 = vmatprep.subr.bf16.mxu0 0
    %1551 = vmatpush1.bf16.msra.mxu0 %v1079
    %1552 = vmatprep.subr.bf16.mxu0 0
    %1553 = vmatpush1.bf16.msra.mxu0 %v1082
    %1554 = vmatprep.subr.bf16.mxu0 0
    %1555 = vmatpush1.bf16.msra.mxu0 %v1085
    %1556 = vmatprep.subr.bf16.mxu0 0
    %1557 = vmatpush1.bf16.msra.mxu0 %v1088
    %1558 = vmatprep.subr.bf16.mxu0 0
    %1559 = vmatpush1.bf16.msra.mxu0 %v1091
    %1560 = vmatprep.subr.bf16.mxu0 0
    %1561 = vmatpush1.bf16.msra.mxu0 0
    %1562 = vmatprep.subr.bf16.mxu0 0
    %1563 = vmatpush1.bf16.msra.mxu0 0
    %1564 = vmatprep.subr.bf16.mxu0 0
    %1565 = vmatpush1.bf16.msra.mxu0 0
    %1566 = vmatprep.subr.bf16.mxu0 0
    %1567 = vmatpush1.bf16.msra.mxu0 0
    %1568 = vmatprep.subr.bf16.mxu0 0
    %1569 = vmatpush1.bf16.msra.mxu0 0
    %1570 = vmatprep.subr.bf16.mxu0 0
    %1571 = vmatpush1.bf16.msra.mxu0 0
    %1572 = vmatprep.subr.bf16.mxu0 0
    %1573 = vmatpush1.bf16.msra.mxu0 0
    %1574 = vmatprep.subr.bf16.mxu0 0
    %1575 = vmatpush1.bf16.msra.mxu0 0
    %1576 = vmatprep.mubr.bf16.mxu0 0
    %1577 = vmatmul.mubr.bf16.gmra.mrb[0].mxu0 %v356
    %v1578 = vpop.f32.mrb[0].mxu0
    %v1579 = vadd.f32 %v1539, %v1578
    %v1580 = vpop.f32.mrb[0].mxu0
    %v1581 = vpop.f32.mrb[0].mxu0
    %v1582 = vpop.f32.mrb[0].mxu0
    %1583 = vdwg.mxu0
    %v1584 = vmax.f32 %v1418, 0.0
    %v1585 = vmax.f32 %v1420, 0.0
    %v1586 = vmax.f32 %v1579, 0.0
    %v1587 = vld [vmem:[#allocation7] sm:$0xff]
    %v1588 = vld [vmem:[#allocation7 + $0x8] sm:$0xff]
    %v1589 = vld [vmem:[#allocation7 + $0x10] sm:$0xff]
    %v1590 = vld [vmem:[#allocation7 + $0x18] sm:$0xff]
    %v1591 = vld [vmem:[#allocation7 + $0x20] sm:$0xff]
    %v1592 = vld [vmem:[#allocation7 + $0x28] sm:$0xff]
    %v1593 = vld [vmem:[#allocation7 + $0x30] sm:$0xff]
    %v1594 = vld [vmem:[#allocation7 + $0x38] sm:$0xff]
    %v1595 = vld [vmem:[#allocation7 + $0x40] sm:$0xff]
    %v1596 = vld [vmem:[#allocation7 + $0x48] sm:$0xff]
    %v1597 = vld [vmem:[#allocation7 + $0x50] sm:$0xff]
    %v1598 = vld [vmem:[#allocation7 + $0x58] sm:$0xff]
    %v1599 = vld [vmem:[#allocation7 + $0x60] sm:$0xff]
    %v1600 = vld [vmem:[#allocation7 + $0x68] sm:$0xff]
    %v1601 = vld [vmem:[#allocation7 + $0x70] sm:$0xff]
    %v1602 = vld [vmem:[#allocation7 + $0x78] sm:$0xff]
    %v1603 = vld [vmem:[#allocation7 + $0x80] sm:$0xff]
    %v1604 = vld [vmem:[#allocation7 + $0x88] sm:$0xff]
    %v1605 = vld [vmem:[#allocation7 + $0x90] sm:$0xff]
    %v1606 = vld [vmem:[#allocation7 + $0x98] sm:$0xff]
    %v1607 = vld [vmem:[#allocation7 + $0xa0] sm:$0xff]
    %v1608 = vld [vmem:[#allocation7 + $0xa8] sm:$0xff]
    %v1609 = vld [vmem:[#allocation7 + $0xb0] sm:$0xff]
    %v1610 = vld [vmem:[#allocation7 + $0xb8] sm:$0xff]
    %v1611 = vld [vmem:[#allocation7 + $0xc0] sm:$0xff]
    %v1612 = vld [vmem:[#allocation7 + $0xc8] sm:$0xff]
    %v1613 = vld [vmem:[#allocation7 + $0xd0] sm:$0xff]
    %v1614 = vld [vmem:[#allocation7 + $0xd8] sm:$0xff]
    %v1615 = vld [vmem:[#allocation7 + $0xe0] sm:$0xff]
    %v1616 = vld [vmem:[#allocation7 + $0xe8] sm:$0xff]
    %v1617 = vld [vmem:[#allocation7 + $0xf0] sm:$0xff]
    %v1618 = vld [vmem:[#allocation7 + $0xf8] sm:$0xff]
    %v1619 = vld [vmem:[#allocation7 + $0x100] sm:$0xff]
    %v1620 = vld [vmem:[#allocation7 + $0x108] sm:$0xff]
    %v1621 = vld [vmem:[#allocation7 + $0x110] sm:$0xff]
    %v1622 = vld [vmem:[#allocation7 + $0x118] sm:$0xff]
    %v1623 = vld [vmem:[#allocation7 + $0x120] sm:$0xff]
    %v1624 = vld [vmem:[#allocation7 + $0x128] sm:$0xff]
    %v1625 = vld [vmem:[#allocation7 + $0x130] sm:$0xff]
    %v1626 = vld [vmem:[#allocation7 + $0x138] sm:$0xff]
    %v1627 = vld [vmem:[#allocation7 + $0x140] sm:$0xff]
    %v1628 = vld [vmem:[#allocation7 + $0x148] sm:$0xff]
    %v1629 = vld [vmem:[#allocation7 + $0x150] sm:$0xff]
    %v1630 = vld [vmem:[#allocation7 + $0x158] sm:$0xff]
    %v1631 = vld [vmem:[#allocation7 + $0x160] sm:$0xff]
    %v1632 = vld [vmem:[#allocation7 + $0x168] sm:$0xff]
    %v1633 = vld [vmem:[#allocation7 + $0x170] sm:$0xff]
    %v1634 = vld [vmem:[#allocation7 + $0x178] sm:$0xff]
    %1635 = vmatprep.subr.mxu0 0.0
    %1636 = vmatpush1.msra.mxu0 %v1587
    %1637 = vmatprep.subr.mxu0 0.0
    %1638 = vmatpush1.msra.mxu0 %v1588
    %1639 = vmatprep.subr.mxu0 0.0
    %1640 = vmatpush1.msra.mxu0 %v1589
    %1641 = vmatprep.subr.mxu0 0.0
    %1642 = vmatpush1.msra.mxu0 %v1590
    %1643 = vmatprep.subr.mxu0 0.0
    %1644 = vmatpush1.msra.mxu0 %v1591
    %1645 = vmatprep.subr.mxu0 0.0
    %1646 = vmatpush1.msra.mxu0 %v1592
    %1647 = vmatprep.subr.mxu0 0.0
    %1648 = vmatpush1.msra.mxu0 %v1593
    %1649 = vmatprep.subr.mxu0 0.0
    %1650 = vmatpush1.msra.mxu0 %v1594
    %1651 = vmatprep.subr.mxu0 0.0
    %1652 = vmatpush1.msra.mxu0 %v1595
    %1653 = vmatprep.subr.mxu0 0.0
    %1654 = vmatpush1.msra.mxu0 %v1596
    %1655 = vmatprep.subr.mxu0 0.0
    %1656 = vmatpush1.msra.mxu0 %v1597
    %1657 = vmatprep.subr.mxu0 0.0
    %1658 = vmatpush1.msra.mxu0 %v1598
    %1659 = vmatprep.subr.mxu0 0.0
    %1660 = vmatpush1.msra.mxu0 %v1599
    %1661 = vmatprep.subr.mxu0 0.0
    %1662 = vmatpush1.msra.mxu0 %v1600
    %1663 = vmatprep.subr.mxu0 0.0
    %1664 = vmatpush1.msra.mxu0 %v1601
    %1665 = vmatprep.subr.mxu0 0.0
    %1666 = vmatpush1.msra.mxu0 %v1602
    %1667 = vmatprep.subr.mxu0 0.0
    %1668 = vmatpush1.msra.mxu0 %v1603
    %1669 = vmatprep.subr.mxu0 0.0
    %1670 = vmatpush1.msra.mxu0 %v1604
    %1671 = vmatprep.subr.mxu0 0.0
    %1672 = vmatpush1.msra.mxu0 %v1605
    %1673 = vmatprep.subr.mxu0 0.0
    %1674 = vmatpush1.msra.mxu0 %v1606
    %1675 = vmatprep.subr.mxu0 0.0
    %1676 = vmatpush1.msra.mxu0 %v1607
    %1677 = vmatprep.subr.mxu0 0.0
    %1678 = vmatpush1.msra.mxu0 %v1608
    %1679 = vmatprep.subr.mxu0 0.0
    %1680 = vmatpush1.msra.mxu0 %v1609
    %1681 = vmatprep.subr.mxu0 0.0
    %1682 = vmatpush1.msra.mxu0 %v1610
    %1683 = vmatprep.subr.mxu0 0.0
    %1684 = vmatpush1.msra.mxu0 %v1611
    %1685 = vmatprep.subr.mxu0 0.0
    %1686 = vmatpush1.msra.mxu0 %v1612
    %1687 = vmatprep.subr.mxu0 0.0
    %1688 = vmatpush1.msra.mxu0 %v1613
    %1689 = vmatprep.subr.mxu0 0.0
    %1690 = vmatpush1.msra.mxu0 %v1614
    %1691 = vmatprep.subr.mxu0 0.0
    %1692 = vmatpush1.msra.mxu0 %v1615
    %1693 = vmatprep.subr.mxu0 0.0
    %1694 = vmatpush1.msra.mxu0 %v1616
    %1695 = vmatprep.subr.mxu0 0.0
    %1696 = vmatpush1.msra.mxu0 %v1617
    %1697 = vmatprep.subr.mxu0 0.0
    %1698 = vmatpush1.msra.mxu0 %v1618
    %1699 = vmatprep.mubr.f32.mxu0 %v1585
    %1700 = vmatmul.mubr.f32.gmra.mrb[0].mxu0 %v1584
    %v1701 = vpop.f32.mrb[0].mxu0
    %v1702 = vadd.f32 0.0, %v1701
    %v1703 = vpop.f32.mrb[0].mxu0
    %1704 = vdwg.mxu0
    %1705 = vmatprep.subr.mxu0 0.0
    %1706 = vmatpush1.msra.mxu0 %v1619
    %1707 = vmatprep.subr.mxu0 0.0
    %1708 = vmatpush1.msra.mxu0 %v1620
    %1709 = vmatprep.subr.mxu0 0.0
    %1710 = vmatpush1.msra.mxu0 %v1621
    %1711 = vmatprep.subr.mxu0 0.0
    %1712 = vmatpush1.msra.mxu0 %v1622
    %1713 = vmatprep.subr.mxu0 0.0
    %1714 = vmatpush1.msra.mxu0 %v1623
    %1715 = vmatprep.subr.mxu0 0.0
    %1716 = vmatpush1.msra.mxu0 %v1624
    %1717 = vmatprep.subr.mxu0 0.0
    %1718 = vmatpush1.msra.mxu0 %v1625
    %1719 = vmatprep.subr.mxu0 0.0
    %1720 = vmatpush1.msra.mxu0 %v1626
    %1721 = vmatprep.subr.mxu0 0.0
    %1722 = vmatpush1.msra.mxu0 %v1627
    %1723 = vmatprep.subr.mxu0 0.0
    %1724 = vmatpush1.msra.mxu0 %v1628
    %1725 = vmatprep.subr.mxu0 0.0
    %1726 = vmatpush1.msra.mxu0 %v1629
    %1727 = vmatprep.subr.mxu0 0.0
    %1728 = vmatpush1.msra.mxu0 %v1630
    %1729 = vmatprep.subr.mxu0 0.0
    %1730 = vmatpush1.msra.mxu0 %v1631
    %1731 = vmatprep.subr.mxu0 0.0
    %1732 = vmatpush1.msra.mxu0 %v1632
    %1733 = vmatprep.subr.mxu0 0.0
    %1734 = vmatpush1.msra.mxu0 %v1633
    %1735 = vmatprep.subr.mxu0 0.0
    %1736 = vmatpush1.msra.mxu0 %v1634
    %1737 = vmatprep.subr.mxu0 0.0
    %1738 = vmatpush1.msra.mxu0 0.0
    %1739 = vmatprep.subr.mxu0 0.0
    %1740 = vmatpush1.msra.mxu0 0.0
    %1741 = vmatprep.subr.mxu0 0.0
    %1742 = vmatpush1.msra.mxu0 0.0
    %1743 = vmatprep.subr.mxu0 0.0
    %1744 = vmatpush1.msra.mxu0 0.0
    %1745 = vmatprep.subr.mxu0 0.0
    %1746 = vmatpush1.msra.mxu0 0.0
    %1747 = vmatprep.subr.mxu0 0.0
    %1748 = vmatpush1.msra.mxu0 0.0
    %1749 = vmatprep.subr.mxu0 0.0
    %1750 = vmatpush1.msra.mxu0 0.0
    %1751 = vmatprep.subr.mxu0 0.0
    %1752 = vmatpush1.msra.mxu0 0.0
    %1753 = vmatprep.subr.mxu0 0.0
    %1754 = vmatpush1.msra.mxu0 0.0
    %1755 = vmatprep.subr.mxu0 0.0
    %1756 = vmatpush1.msra.mxu0 0.0
    %1757 = vmatprep.subr.mxu0 0.0
    %1758 = vmatpush1.msra.mxu0 0.0
    %1759 = vmatprep.subr.mxu0 0.0
    %1760 = vmatpush1.msra.mxu0 0.0
    %1761 = vmatprep.subr.mxu0 0.0
    %1762 = vmatpush1.msra.mxu0 0.0
    %1763 = vmatprep.subr.mxu0 0.0
    %1764 = vmatpush1.msra.mxu0 0.0
    %1765 = vmatprep.subr.mxu0 0.0
    %1766 = vmatpush1.msra.mxu0 0.0
    %1767 = vmatprep.subr.mxu0 0.0
    %1768 = vmatpush1.msra.mxu0 0.0
    %1769 = vmatprep.mubr.f32.mxu0 0.0
    %1770 = vmatmul.mubr.f32.gmra.mrb[0].mxu0 %v1586
    %v1771 = vpop.f32.mrb[0].mxu0
    %v1772 = vadd.f32 %v1702, %v1771
    %v1773 = vpop.f32.mrb[0].mxu0
    %1774 = vdwg.mxu0
    %v1775 = vld [vmem:[#allocation8] sm:$0xff]
    %v1776 = vld [vmem:[#allocation8 + $0x8] sm:$0xff]
    %v1777 = vld [vmem:[#allocation8 + $0x10] sm:$0xff]
    %v1778 = vld [vmem:[#allocation8 + $0x18] sm:$0xff]
    %v1779 = vld [vmem:[#allocation8 + $0x20] sm:$0xff]
    %v1780 = vld [vmem:[#allocation8 + $0x28] sm:$0xff]
    %v1781 = vld [vmem:[#allocation8 + $0x30] sm:$0xff]
    %v1782 = vld [vmem:[#allocation8 + $0x38] sm:$0xff]
    %v1783 = vld [vmem:[#allocation8 + $0x40] sm:$0xff]
    %v1784 = vld [vmem:[#allocation8 + $0x48] sm:$0xff]
    %v1785 = vld [vmem:[#allocation8 + $0x50] sm:$0xff]
    %v1786 = vld [vmem:[#allocation8 + $0x58] sm:$0xff]
    %v1787 = vld [vmem:[#allocation8 + $0x60] sm:$0xff]
    %v1788 = vld [vmem:[#allocation8 + $0x68] sm:$0xff]
    %v1789 = vld [vmem:[#allocation8 + $0x70] sm:$0xff]
    %v1790 = vld [vmem:[#allocation8 + $0x78] sm:$0xff]
    %v1791 = vld [vmem:[%s4] sm:$0x1]
    %v1793 = vlaneseq
    %v1794 = vshrl.u32 %v1793, 7
    %v1795 = vsub.s32 0, %v1794
    %v1796 = vrot.slane %v1791, %v1795
    %1798 = vmatprep.subr.mxu0 0.0
    %1799 = vmatpush1.msra.mxu0 %v1775
    %1800 = vmatprep.subr.mxu0 0.0
    %1801 = vmatpush1.msra.mxu0 %v1776
    %1802 = vmatprep.subr.mxu0 0.0
    %1803 = vmatpush1.msra.mxu0 %v1777
    %1804 = vmatprep.subr.mxu0 0.0
    %1805 = vmatpush1.msra.mxu0 %v1778
    %1806 = vmatprep.subr.mxu0 0.0
    %1807 = vmatpush1.msra.mxu0 %v1779
    %1808 = vmatprep.subr.mxu0 0.0
    %1809 = vmatpush1.msra.mxu0 %v1780
    %1810 = vmatprep.subr.mxu0 0.0
    %1811 = vmatpush1.msra.mxu0 %v1781
    %1812 = vmatprep.subr.mxu0 0.0
    %1813 = vmatpush1.msra.mxu0 %v1782
    %1814 = vmatprep.subr.mxu0 0.0
    %1815 = vmatpush1.msra.mxu0 %v1783
    %1816 = vmatprep.subr.mxu0 0.0
    %1817 = vmatpush1.msra.mxu0 %v1784
    %1818 = vmatprep.subr.mxu0 0.0
    %1819 = vmatpush1.msra.mxu0 %v1785
    %1820 = vmatprep.subr.mxu0 0.0
    %1821 = vmatpush1.msra.mxu0 %v1786
    %1822 = vmatprep.subr.mxu0 0.0
    %1823 = vmatpush1.msra.mxu0 %v1787
    %1824 = vmatprep.subr.mxu0 0.0
    %1825 = vmatpush1.msra.mxu0 %v1788
    %1826 = vmatprep.subr.mxu0 0.0
    %1827 = vmatpush1.msra.mxu0 %v1789
    %1828 = vmatprep.subr.mxu0 0.0
    %1829 = vmatpush1.msra.mxu0 %v1790
    %1830 = vmatprep.subr.mxu0 0.0
    %1831 = vmatpush1.msra.mxu0 0.0
    %1832 = vmatprep.subr.mxu0 0.0
    %1833 = vmatpush1.msra.mxu0 0.0
    %1834 = vmatprep.subr.mxu0 0.0
    %1835 = vmatpush1.msra.mxu0 0.0
    %1836 = vmatprep.subr.mxu0 0.0
    %1837 = vmatpush1.msra.mxu0 0.0
    %1838 = vmatprep.subr.mxu0 0.0
    %1839 = vmatpush1.msra.mxu0 0.0
    %1840 = vmatprep.subr.mxu0 0.0
    %1841 = vmatpush1.msra.mxu0 0.0
    %1842 = vmatprep.subr.mxu0 0.0
    %1843 = vmatpush1.msra.mxu0 0.0
    %1844 = vmatprep.subr.mxu0 0.0
    %1845 = vmatpush1.msra.mxu0 0.0
    %1846 = vmatprep.subr.mxu0 0.0
    %1847 = vmatpush1.msra.mxu0 0.0
    %1848 = vmatprep.subr.mxu0 0.0
    %1849 = vmatpush1.msra.mxu0 0.0
    %1850 = vmatprep.subr.mxu0 0.0
    %1851 = vmatpush1.msra.mxu0 0.0
    %1852 = vmatprep.subr.mxu0 0.0
    %1853 = vmatpush1.msra.mxu0 0.0
    %1854 = vmatprep.subr.mxu0 0.0
    %1855 = vmatpush1.msra.mxu0 0.0
    %1856 = vmatprep.subr.mxu0 0.0
    %1857 = vmatpush1.msra.mxu0 0.0
    %1858 = vmatprep.subr.mxu0 0.0
    %1859 = vmatpush1.msra.mxu0 0.0
    %1860 = vmatprep.subr.mxu0 0.0
    %1861 = vmatpush1.msra.mxu0 0.0
    %1862 = vmatprep.mubr.f32.mxu0 0.0
    %1863 = vmatmul.mubr.f32.gmra.mrb[0].mxu0 %v1772
    %v1864 = vpop.f32.mrb[0].mxu0
    %v1865 = vadd.f32 %v1796, %v1864
    %v1866 = vpop.f32.mrb[0].mxu0
    %1867 = vdwg.mxu0
    %v1868 = vmax.f32 %v1865, 0.0
    %v1869 = vld [vmem:[#allocation10] sm:$0xff]
    %v1870 = vld [vmem:[#allocation10 + $0x8] sm:$0xff]
    %v1871 = vld [vmem:[#allocation10 + $0x10] sm:$0xff]
    %v1872 = vld [vmem:[#allocation10 + $0x18] sm:$0xff]
    %v1873 = vld [vmem:[#allocation10 + $0x20] sm:$0xff]
    %v1874 = vld [vmem:[#allocation10 + $0x28] sm:$0xff]
    %v1875 = vld [vmem:[#allocation10 + $0x30] sm:$0xff]
    %v1876 = vld [vmem:[#allocation10 + $0x38] sm:$0xff]
    %v1877 = vld [vmem:[#allocation10 + $0x40] sm:$0xff]
    %v1878 = vld [vmem:[#allocation10 + $0x48] sm:$0xff]
    %v1879 = vld [vmem:[#allocation10 + $0x50] sm:$0xff]
    %v1880 = vld [vmem:[#allocation10 + $0x58] sm:$0xff]
    %v1881 = vld [vmem:[#allocation10 + $0x60] sm:$0xff]
    %v1882 = vld [vmem:[#allocation10 + $0x68] sm:$0xff]
    %v1883 = vld [vmem:[#allocation10 + $0x70] sm:$0xff]
    %v1884 = vld [vmem:[#allocation10 + $0x78] sm:$0xff]
    %1885 = vmatprep.subr.mxu0 0.0
    %1886 = vmatpush1.msra.mxu0 %v1869
    %1887 = vmatprep.subr.mxu0 0.0
    %1888 = vmatpush1.msra.mxu0 %v1870
    %1889 = vmatprep.subr.mxu0 0.0
    %1890 = vmatpush1.msra.mxu0 %v1871
    %1891 = vmatprep.subr.mxu0 0.0
    %1892 = vmatpush1.msra.mxu0 %v1872
    %1893 = vmatprep.subr.mxu0 0.0
    %1894 = vmatpush1.msra.mxu0 %v1873
    %1895 = vmatprep.subr.mxu0 0.0
    %1896 = vmatpush1.msra.mxu0 %v1874
    %1897 = vmatprep.subr.mxu0 0.0
    %1898 = vmatpush1.msra.mxu0 %v1875
    %1899 = vmatprep.subr.mxu0 0.0
    %1900 = vmatpush1.msra.mxu0 %v1876
    %1901 = vmatprep.subr.mxu0 0.0
    %1902 = vmatpush1.msra.mxu0 %v1877
    %1903 = vmatprep.subr.mxu0 0.0
    %1904 = vmatpush1.msra.mxu0 %v1878
    %1905 = vmatprep.subr.mxu0 0.0
    %1906 = vmatpush1.msra.mxu0 %v1879
    %1907 = vmatprep.subr.mxu0 0.0
    %1908 = vmatpush1.msra.mxu0 %v1880
    %1909 = vmatprep.subr.mxu0 0.0
    %1910 = vmatpush1.msra.mxu0 %v1881
    %1911 = vmatprep.subr.mxu0 0.0
    %1912 = vmatpush1.msra.mxu0 %v1882
    %1913 = vmatprep.subr.mxu0 0.0
    %1914 = vmatpush1.msra.mxu0 %v1883
    %1915 = vmatprep.subr.mxu0 0.0
    %1916 = vmatpush1.msra.mxu0 %v1884
    %1917 = vmatprep.subr.mxu0 0.0
    %1918 = vmatpush1.msra.mxu0 0.0
    %1919 = vmatprep.subr.mxu0 0.0
    %1920 = vmatpush1.msra.mxu0 0.0
    %1921 = vmatprep.subr.mxu0 0.0
    %1922 = vmatpush1.msra.mxu0 0.0
    %1923 = vmatprep.subr.mxu0 0.0
    %1924 = vmatpush1.msra.mxu0 0.0
    %1925 = vmatprep.subr.mxu0 0.0
    %1926 = vmatpush1.msra.mxu0 0.0
    %1927 = vmatprep.subr.mxu0 0.0
    %1928 = vmatpush1.msra.mxu0 0.0
    %1929 = vmatprep.subr.mxu0 0.0
    %1930 = vmatpush1.msra.mxu0 0.0
    %1931 = vmatprep.subr.mxu0 0.0
    %1932 = vmatpush1.msra.mxu0 0.0
    %1933 = vmatprep.subr.mxu0 0.0
    %1934 = vmatpush1.msra.mxu0 0.0
    %1935 = vmatprep.subr.mxu0 0.0
    %1936 = vmatpush1.msra.mxu0 0.0
    %1937 = vmatprep.subr.mxu0 0.0
    %1938 = vmatpush1.msra.mxu0 0.0
    %1939 = vmatprep.subr.mxu0 0.0
    %1940 = vmatpush1.msra.mxu0 0.0
    %1941 = vmatprep.subr.mxu0 0.0
    %1942 = vmatpush1.msra.mxu0 0.0
    %1943 = vmatprep.subr.mxu0 0.0
    %1944 = vmatpush1.msra.mxu0 0.0
    %1945 = vmatprep.subr.mxu0 0.0
    %1946 = vmatpush1.msra.mxu0 0.0
    %1947 = vmatprep.subr.mxu0 0.0
    %1948 = vmatpush1.msra.mxu0 0.0
    %1949 = vmatprep.mubr.f32.mxu0 0.0
    %1950 = vmatmul.mubr.f32.gmra.mrb[0].mxu0 %v1868
    %v1951 = vpop.f32.mrb[0].mxu0
    %v1952 = vadd.f32 0.0, %v1951
    %v1953 = vpop.f32.mrb[0].mxu0
    %1954 = vdwg.mxu0
    %v1955 = vmax.f32 %v1952, 0.0
    %v1956 = vld [vmem:[#allocation11] sm:$0xff]
    %v1957 = vld [vmem:[#allocation11 + $0x8] sm:$0xff]
    %v1958 = vld [vmem:[#allocation11 + $0x10] sm:$0xff]
    %v1959 = vld [vmem:[#allocation11 + $0x18] sm:$0xff]
    %v1960 = vld [vmem:[#allocation11 + $0x20] sm:$0xff]
    %v1961 = vld [vmem:[#allocation11 + $0x28] sm:$0xff]
    %v1962 = vld [vmem:[#allocation11 + $0x30] sm:$0xff]
    %v1963 = vld [vmem:[#allocation11 + $0x38] sm:$0xff]
    %v1964 = vld [vmem:[#allocation11 + $0x40] sm:$0xff]
    %v1965 = vld [vmem:[#allocation11 + $0x48] sm:$0xff]
    %v1966 = vld [vmem:[#allocation11 + $0x50] sm:$0xff]
    %v1967 = vld [vmem:[#allocation11 + $0x58] sm:$0xff]
    %v1968 = vld [vmem:[#allocation11 + $0x60] sm:$0xff]
    %v1969 = vld [vmem:[#allocation11 + $0x68] sm:$0xff]
    %v1970 = vld [vmem:[#allocation11 + $0x70] sm:$0xff]
    %v1971 = vld [vmem:[#allocation11 + $0x78] sm:$0xff]
    %v1972 = vld [vmem:[%s7] sm:$0x1]
    %v1974 = vlaneseq
    %v1975 = vshrl.u32 %v1974, 7
    %v1976 = vsub.s32 0, %v1975
    %v1977 = vrot.slane %v1972, %v1976
    %1979 = vmatprep.subr.mxu0 0.0
    %1980 = vmatpush1.msra.mxu0 %v1956
    %1981 = vmatprep.subr.mxu0 0.0
    %1982 = vmatpush1.msra.mxu0 %v1957
    %1983 = vmatprep.subr.mxu0 0.0
    %1984 = vmatpush1.msra.mxu0 %v1958
    %1985 = vmatprep.subr.mxu0 0.0
    %1986 = vmatpush1.msra.mxu0 %v1959
    %1987 = vmatprep.subr.mxu0 0.0
    %1988 = vmatpush1.msra.mxu0 %v1960
    %1989 = vmatprep.subr.mxu0 0.0
    %1990 = vmatpush1.msra.mxu0 %v1961
    %1991 = vmatprep.subr.mxu0 0.0
    %1992 = vmatpush1.msra.mxu0 %v1962
    %1993 = vmatprep.subr.mxu0 0.0
    %1994 = vmatpush1.msra.mxu0 %v1963
    %1995 = vmatprep.subr.mxu0 0.0
    %1996 = vmatpush1.msra.mxu0 %v1964
    %1997 = vmatprep.subr.mxu0 0.0
    %1998 = vmatpush1.msra.mxu0 %v1965
    %1999 = vmatprep.subr.mxu0 0.0
    %2000 = vmatpush1.msra.mxu0 %v1966
    %2001 = vmatprep.subr.mxu0 0.0
    %2002 = vmatpush1.msra.mxu0 %v1967
    %2003 = vmatprep.subr.mxu0 0.0
    %2004 = vmatpush1.msra.mxu0 %v1968
    %2005 = vmatprep.subr.mxu0 0.0
    %2006 = vmatpush1.msra.mxu0 %v1969
    %2007 = vmatprep.subr.mxu0 0.0
    %2008 = vmatpush1.msra.mxu0 %v1970
    %2009 = vmatprep.subr.mxu0 0.0
    %2010 = vmatpush1.msra.mxu0 %v1971
    %2011 = vmatprep.subr.mxu0 0.0
    %2012 = vmatpush1.msra.mxu0 0.0
    %2013 = vmatprep.subr.mxu0 0.0
    %2014 = vmatpush1.msra.mxu0 0.0
    %2015 = vmatprep.subr.mxu0 0.0
    %2016 = vmatpush1.msra.mxu0 0.0
    %2017 = vmatprep.subr.mxu0 0.0
    %2018 = vmatpush1.msra.mxu0 0.0
    %2019 = vmatprep.subr.mxu0 0.0
    %2020 = vmatpush1.msra.mxu0 0.0
    %2021 = vmatprep.subr.mxu0 0.0
    %2022 = vmatpush1.msra.mxu0 0.0
    %2023 = vmatprep.subr.mxu0 0.0
    %2024 = vmatpush1.msra.mxu0 0.0
    %2025 = vmatprep.subr.mxu0 0.0
    %2026 = vmatpush1.msra.mxu0 0.0
    %2027 = vmatprep.subr.mxu0 0.0
    %2028 = vmatpush1.msra.mxu0 0.0
    %2029 = vmatprep.subr.mxu0 0.0
    %2030 = vmatpush1.msra.mxu0 0.0
    %2031 = vmatprep.subr.mxu0 0.0
    %2032 = vmatpush1.msra.mxu0 0.0
    %2033 = vmatprep.subr.mxu0 0.0
    %2034 = vmatpush1.msra.mxu0 0.0
    %2035 = vmatprep.subr.mxu0 0.0
    %2036 = vmatpush1.msra.mxu0 0.0
    %2037 = vmatprep.subr.mxu0 0.0
    %2038 = vmatpush1.msra.mxu0 0.0
    %2039 = vmatprep.subr.mxu0 0.0
    %2040 = vmatpush1.msra.mxu0 0.0
    %2041 = vmatprep.subr.mxu0 0.0
    %2042 = vmatpush1.msra.mxu0 0.0
    %2043 = vmatprep.mubr.f32.mxu0 0.0
    %2044 = vmatmul.mubr.f32.gmra.mrb[0].mxu0 %v1955
    %v2045 = vpop.f32.mrb[0].mxu0
    %v2046 = vadd.f32 %v1977, %v2045
    %v2047 = vpop.f32.mrb[0].mxu0
    %2048 = vdwg.mxu0
    %2049 = vmax.xlane.f32.xlu0 %v2046
    %v2050 = vpop.xlane.xlu0 %2049
    %v2051 = vsub.f32 %v2046, %v2050
    %v2052 = vmul.f32 %v2051, 1.442695
    %v2053 = vpow.pop %v2052
    %2054 = vadd.xlane.f32.xlu0 %v2053
    %v2055 = vpop.xlane.xlu0 %2054
    %v2056 = vlog2.pop %v2055
    %v2057 = vmul.f32 %v2056, 0.6931472
    %v2058 = vsub.f32 %v2051, %v2057
    %2059 = vst [vmem:[#allocation13] sm:$0xff] %v2058
    // Predicated region
    $region58: #{tpu_custom_call.1} parent=1 // pred_check
      _
    $region59: #{tpu_custom_call.1} parent=1 // pred_check_branch
      %2061 = sbr.rel (0) target = $region61
    $region60: #{tpu_custom_call.1} parent=1 // pred_region
      %s2063 = ssub.s32 128, 128
      %2064 = vsyncadd [#allocation4], %s2063
      %s2066 = sshll.u32 [#allocation13], 4
      %s2067 = int_to_ptr.vmem [resolvable:$true] %s2066
      %2069 = dma.vmem_to_hbm [thread:$0]  %s2067, 128, %s8, [#allocation4]
    $region61: #{tpu_custom_call.1} parent=1 // pred_fallthru
      _
    // Predicated region
    $region62: #{tpu_custom_call.1} parent=1 // pred_check
      _
    $region63: #{tpu_custom_call.1} parent=1 // pred_check_branch
      %2071 = sbr.rel (0) target = $region65
    $region64: #{tpu_custom_call.1} parent=1 // pred_region
      %2072 = dma.done [#allocation4], 128
    $region65: #{tpu_custom_call.1} parent=1 // pred_fallthru
      _
    %2073 = vsyncpa [#allocation3], 1
    %2074 = vsyncpa [#allocation6], 1
    %2075 = vsyncpa [#allocation9], 1
    %2076 = vsyncpa [#allocation12], 1
    %2077 = vsyncpa [#allocation4], 1

</llo_original>
